<compile_context>
chip_gen: v7x
topology: tpu7x:2x2x1
jax: 0.10.0
libtpu: 0.0.40
codegen_flags: <defaults>
</compile_context>

<pallas_src>
import math
from functools import partial

import jax
import jax.numpy as jnp
from jax.experimental import pallas as pl
from jax.experimental.pallas import tpu as pltpu

# ---------------- config (small synthetic shapes) ----------------
B = 2            # batch
L_PAD = 8        # padded sequence length
VOCAB = 20
POS_VOCAB = 10
POST_VOCAB = 10
EMBED_DIM = 16
POS_DIM = 8
POST_DIM = 8
IN_DIM = EMBED_DIM + POS_DIM + POST_DIM     # 32, LSTM input size
RNN_HIDDEN = 16
MEM_DIM = 16                                # mem_dim == rnn_hidden (as the module requires)
GCN_LAYERS = 2                              # fused kernel below assumes exactly 2 layers
HEADS = 2
D_MODEL = 2 * MEM_DIM                       # attention d_model = mem_dim * 2 = 32
DK = D_MODEL // HEADS                       # 16


# ---------------- Pallas kernel: fused adjacency + 2 GCN layers (whole batch) ----------------
def _fused_gcn_kernel(x_ref, wqk_ref, bqk_ref, madd_ref, rmask_ref,
                      w0_ref, b0_ref, w1_ref, b1_ref, out_ref):
    Bb, L, D = x_ref.shape

    x_all = x_ref[...]                               # (B, L, D)
    xf = x_all.reshape(Bb * L, D)                    # fold batch into the matmul M dim

    # Fused (pre-scaled) Q|K projection for the whole batch: one (B*L, D)@(D, 2D) matmul.
    qk = jnp.dot(xf, wqk_ref[...], preferred_element_type=jnp.float32) + bqk_ref[...]
    # Reassociated layer-0 feature projection: adj @ (x @ W0) == (adj @ x) @ W0.
    # Bias b0 is added AFTER the adjacency matmul (and scaled by denom_inv) below.
    xw0 = jnp.dot(xf, w0_ref[...], preferred_element_type=jnp.float32)   # (B*L, MEM_DIM)

    # Batch-invariant diagonal mask, built once per invocation (no grid to rerun it).
    rows = jax.lax.broadcasted_iota(jnp.int32, (L, L), 0)
    cols = jax.lax.broadcasted_iota(jnp.int32, (L, L), 1)
    is_diag = rows == cols

    w1 = w1_ref[...]
    b0 = b0_ref[...]
    b1 = b1_ref[...]

    for b in range(Bb):                              # static unroll over batch (B=2)
        q = qk[b * L:(b + 1) * L, :D_MODEL]          # (L, D_MODEL), Wq already * 1/sqrt(dk)
        k = qk[b * L:(b + 1) * L, D_MODEL:]
        madd = madd_ref[b]                           # (1, L) additive key mask (0 / -1e9)

        acc = jnp.zeros((L, L), jnp.float32)
        for h in range(HEADS):                       # static unroll over heads
            qh = q[:, h * DK:(h + 1) * DK]
            kh = k[:, h * DK:(h + 1) * DK]
            # q @ k^T without materializing k.T (contract last dims).
            s = jax.lax.dot_general(qh, kh, (((1,), (1,)), ((), ())),
                                    preferred_element_type=jnp.float32)
            s = s + madd                             # hoisted additive key mask
            m = jnp.max(s, axis=-1, keepdims=True)
            e = jnp.exp(s - m)
            # 1/HEADS head-average folded into the softmax normalizer (EUP reciprocal).
            inv = pl.reciprocal(jnp.sum(e, axis=-1, keepdims=True) * HEADS, approx=True)
            acc = acc + e * inv

        rmask = rmask_ref[b]                         # (L, 1) row mask (mask_)
        # diag(adj) := 1, then zero the pad rows (same order as the reference).
        adj = jnp.where(is_diag, 1.0, acc) * rmask
        denom_inv = pl.reciprocal(                   # 1 / (sum(adj, -1) + 1)
            jnp.sum(adj, axis=1, keepdims=True) + 1.0, approx=True)

        # ---- GCN layer 0 (reassociated): relu((adj @ (x @ W0) + b0) * denom_inv) ----
        ax0 = jnp.dot(adj, xw0[b * L:(b + 1) * L], preferred_element_type=jnp.float32)
        h0 = jnp.maximum((ax0 + b0) * denom_inv, 0.0)

        # ---- GCN layer 1 (gcn_drop is eval-mode identity between layers) ----
        ax1 = jnp.dot(adj, h0, preferred_element_type=jnp.float32)
        axw1 = jnp.dot(ax1, w1, preferred_element_type=jnp.float32) + b1
        out_ref[b] = jnp.maximum(axw1 * denom_inv, 0.0)


def fused_attn_gcn(x, wqk, bqk, key_mask_add, row_mask, w0, b0, w1, b1):
    Bb, L, _ = x.shape
    Dout = w1.shape[-1]
    # Single grid-less invocation: all operands are whole-array VMEM residents
    # (everything here is ~KB-scale), so there is exactly one launch and one set
    # of DMA descriptors for the whole batch.
    vspec = pl.BlockSpec(memory_space=pltpu.MemorySpace.VMEM)
    return pl.pallas_call(
        _fused_gcn_kernel,
        out_shape=jax.ShapeDtypeStruct((Bb, L, Dout), jnp.float32),
        in_specs=[vspec] * 9,
        out_specs=vspec,
    )(x, wqk, bqk, key_mask_add, row_mask, w0, b0, w1, b1)


# ---------------- bidirectional LSTM (packed-sequence semantics) in JAX ----------------
def lstm_direction(x, lengths, Wih, Whh, bih, bhh):
    Bb, L, _ = x.shape
    H = Whh.shape[1]

    def step(carry, inp):
        h, c = carry
        xt, valid = inp                                            # (B, Din), (B,)
        gates = xt @ Wih.T + bih + h @ Whh.T + bhh                 # PyTorch gate order i,f,g,o
        i = jax.nn.sigmoid(gates[:, :H])
        f = jax.nn.sigmoid(gates[:, H:2 * H])
        g = jnp.tanh(gates[:, 2 * H:3 * H])
        o = jax.nn.sigmoid(gates[:, 3 * H:])
        c_new = f * c + i * g
        h_new = o * jnp.tanh(c_new)
        v = valid[:, None].astype(x.dtype)
        out = h_new * v                                            # pad positions -> 0
        h = h_new * v + h * (1.0 - v)                              # state frozen past length
        c = c_new * v + c * (1.0 - v)
        return (h, c), out

    h0 = jnp.zeros((Bb, H), x.dtype)
    c0 = jnp.zeros((Bb, H), x.dtype)
    tmask = jnp.arange(L)[:, None] < lengths[None, :]              # (L, B)
    (_, _), outs = jax.lax.scan(step, (h0, c0), (jnp.transpose(x, (1, 0, 2)), tmask))
    return jnp.transpose(outs, (1, 0, 2))


def reverse_padded(x, lengths):
    Bb, L, _ = x.shape
    t = jnp.arange(L)[None, :]
    idx = lengths[:, None] - 1 - t                                 # reverse within valid length
    valid = idx >= 0
    idx = jnp.clip(idx, 0, L - 1)
    out = jnp.take_along_axis(x, idx[:, :, None], axis=1)
    return out * valid[:, :, None].astype(x.dtype)


def bilstm(x, lengths, p):
    fwd = lstm_direction(x, lengths, p['wih_f'], p['whh_f'], p['bih_f'], p['bhh_f'])
    x_rev = reverse_padded(x, lengths)
    bwd = lstm_direction(x_rev, lengths, p['wih_b'], p['whh_b'], p['bih_b'], p['bhh_b'])
    bwd = reverse_padded(bwd, lengths)
    return jnp.concatenate([fwd, bwd], axis=-1)                    # (B, L, 2H)


# ---------------- parameter init (deterministic, synthetic) ----------------
def init_params(key):
    def nrm(k, shape, scale=0.1):
        return scale * jax.random.normal(k, shape, dtype=jnp.float32)

    keys = jax.random.split(key, 20)
    p = {
        'emb': nrm(keys[0], (VOCAB, EMBED_DIM)),
        'pos_emb': nrm(keys[1], (POS_VOCAB, POS_DIM)),
        'post_emb': nrm(keys[2], (POST_VOCAB, POST_DIM)),
        'lstm': {
            'wih_f': nrm(keys[3], (4 * RNN_HIDDEN, IN_DIM)),
            'whh_f': nrm(keys[4], (4 * RNN_HIDDEN, RNN_HIDDEN)),
            'bih_f': nrm(keys[5], (4 * RNN_HIDDEN,)),
            'bhh_f': nrm(keys[6], (4 * RNN_HIDDEN,)),
            'wih_b': nrm(keys[7], (4 * RNN_HIDDEN, IN_DIM)),
            'whh_b': nrm(keys[8], (4 * RNN_HIDDEN, RNN_HIDDEN)),
            'bih_b': nrm(keys[9], (4 * RNN_HIDDEN,)),
            'bhh_b': nrm(keys[10], (4 * RNN_HIDDEN,)),
        },
        # attention linears (pre-transposed: (in, out)) and biases as (1, out)
        'wq': nrm(keys[11], (D_MODEL, D_MODEL)),
        'bq': nrm(keys[12], (1, D_MODEL)),
        'wk': nrm(keys[13], (D_MODEL, D_MODEL)),
        'bk': nrm(keys[14], (1, D_MODEL)),
        # GCN weight_list (pre-transposed) — layer0: in_dim->mem_dim, layer1: mem_dim->mem_dim
        'gcn_w': [nrm(keys[15], (D_MODEL, MEM_DIM)), nrm(keys[16], (MEM_DIM, MEM_DIM))],
        'gcn_b': [nrm(keys[17], (1, MEM_DIM)), nrm(keys[18], (1, MEM_DIM))],
    }
    return p


# ---------------- forward (mirrors GCN.forward, eval-mode dropout) ----------------
@partial(jax.jit, static_argnames=('maxlen',))
def gcn_forward(params, tok, pos, post, lengths, maxlen):
    # embeddings: [word, pos, post] concatenated on feature dim
    word = params['emb'][tok]
    pos_e = params['pos_emb'][pos]
    post_e = params['post_emb'][post]
    embs = jnp.concatenate([word, pos_e, post_e], axis=2)          # (B, L, IN_DIM)

    # bidirectional LSTM with packed-sequence semantics, then truncate to maxlen
    rnn_out = bilstm(embs, lengths, params['lstm'])                # (B, L, 2H)
    gcn_inputs = rnn_out[:, :maxlen]

    tok_t = tok[:, :maxlen]
    # additive key mask (0 valid / -1e9 masked), shape (B, 1, maxlen)
    key_mask_add = jnp.where(tok_t != 0, 0.0, -1e9).astype(jnp.float32)[:, None, :]
    # row mask mask_, shape (B, maxlen, 1)
    mask_ = (tok_t != 0).astype(jnp.float32)[:, :, None]

    # fused Q|K projection weights with 1/sqrt(dk) folded into the Wq|bq halves
    scale = 1.0 / math.sqrt(DK)
    wqk = jnp.concatenate([params['wq'] * scale, params['wk']], axis=1)    # (D, 2D)
    bqk = jnp.concatenate([params['bq'] * scale, params['bk']], axis=1)    # (1, 2D)

    # adjacency + both GCN layers for the whole batch in ONE grid-less pallas_call
    outputs = fused_attn_gcn(
        gcn_inputs, wqk, bqk, key_mask_add, mask_,
        params['gcn_w'][0], params['gcn_b'][0],
        params['gcn_w'][1], params['gcn_b'][1])
    return outputs                                                 # (B, maxlen, MEM_DIM)


if __name__ == "__main__":
    key = jax.random.PRNGKey(0)
    pkey, tkey, poskey, postkey = jax.random.split(key, 4)

    params = init_params(pkey)

    lengths_list = [8, 6]
    lengths = jnp.array(lengths_list, dtype=jnp.int32)
    maxlen = int(max(lengths_list))                                # static, like max(l.data)

    valid = jnp.arange(L_PAD)[None, :] < lengths[:, None]          # (B, L)
    tok = jnp.where(valid, jax.random.randint(tkey, (B, L_PAD), 1, VOCAB), 0).astype(jnp.int32)
    pos = jnp.where(valid, jax.random.randint(poskey, (B, L_PAD), 1, POS_VOCAB), 0).astype(jnp.int32)
    post = jnp.where(valid, jax.random.randint(postkey, (B, L_PAD), 1, POST_VOCAB), 0).astype(jnp.int32)

    out = gcn_forward(params, tok, pos, post, lengths, maxlen)
    out = jax.block_until_ready(out)
    assert out.shape == (B, maxlen, MEM_DIM)
    print("KERNEL_OK")
</pallas_src>

<mosaic_0001>
module attributes {stable_mosaic.version = 11 : i64} {
  func.func @_fused_gcn_kernel(%arg0: memref<2x8x32xf32, #tpu.memory_space<vmem>>, %arg1: memref<32x64xf32, #tpu.memory_space<vmem>>, %arg2: memref<1x64xf32, #tpu.memory_space<vmem>>, %arg3: memref<2x1x8xf32, #tpu.memory_space<vmem>>, %arg4: memref<2x8x1xf32, #tpu.memory_space<vmem>>, %arg5: memref<32x16xf32, #tpu.memory_space<vmem>>, %arg6: memref<1x16xf32, #tpu.memory_space<vmem>>, %arg7: memref<16x16xf32, #tpu.memory_space<vmem>>, %arg8: memref<1x16xf32, #tpu.memory_space<vmem>>, %arg9: memref<2x8x16xf32, #tpu.memory_space<vmem>>) attributes {dimension_semantics = [], scalar_prefetch = 0 : i64, scratch_operands = 0 : i64, tpu.core_type = #tpu.core_type<tc>} {
    %c0 = arith.constant 0 : index
    %c0_0 = arith.constant 0 : index
    %c0_1 = arith.constant 0 : index
    %0 = vector.load %arg0[%c0, %c0_0, %c0_1] : memref<2x8x32xf32, #tpu.memory_space<vmem>>, vector<2x8x32xf32>
    %1 = vector.shape_cast %0 : vector<2x8x32xf32> to vector<16x32xf32>
    %c0_2 = arith.constant 0 : index
    %c0_3 = arith.constant 0 : index
    %2 = vector.load %arg1[%c0_2, %c0_3] : memref<32x64xf32, #tpu.memory_space<vmem>>, vector<32x64xf32>
    %cst = arith.constant dense<0.000000e+00> : vector<16x64xf32>
    %3 = tpu.matmul %1, %2, %cst {dimension_numbers = #tpu.dot_dimension_numbers<[1], [0], [0], [1], [0, 0, 1, 1], [], []>} : vector<16x32xf32>, vector<32x64xf32>, vector<16x64xf32> -> vector<16x64xf32>
    %c0_4 = arith.constant 0 : index
    %c0_5 = arith.constant 0 : index
    %4 = vector.load %arg2[%c0_4, %c0_5] : memref<1x64xf32, #tpu.memory_space<vmem>>, vector<1x64xf32>
    %5 = vector.broadcast %4 : vector<1x64xf32> to vector<16x64xf32>
    %6 = arith.addf %3, %5 : vector<16x64xf32>
    %c0_6 = arith.constant 0 : index
    %c0_7 = arith.constant 0 : index
    %7 = vector.load %arg5[%c0_6, %c0_7] : memref<32x16xf32, #tpu.memory_space<vmem>>, vector<32x16xf32>
    %cst_8 = arith.constant dense<0.000000e+00> : vector<16x16xf32>
    %8 = tpu.matmul %1, %7, %cst_8 {dimension_numbers = #tpu.dot_dimension_numbers<[1], [0], [0], [1], [0, 0, 1, 1], [], []>} : vector<16x32xf32>, vector<32x16xf32>, vector<16x16xf32> -> vector<16x16xf32>
    %9 = tpu.iota {dimensions = array<i32: 0>} : vector<8x8xi32>
    %10 = tpu.iota {dimensions = array<i32: 1>} : vector<8x8xi32>
    %11 = arith.cmpi eq, %9, %10 : vector<8x8xi32>
    %c0_9 = arith.constant 0 : index
    %c0_10 = arith.constant 0 : index
    %12 = vector.load %arg7[%c0_9, %c0_10] : memref<16x16xf32, #tpu.memory_space<vmem>>, vector<16x16xf32>
    %c0_11 = arith.constant 0 : index
    %c0_12 = arith.constant 0 : index
    %13 = vector.load %arg6[%c0_11, %c0_12] : memref<1x16xf32, #tpu.memory_space<vmem>>, vector<1x16xf32>
    %c0_13 = arith.constant 0 : index
    %c0_14 = arith.constant 0 : index
    %14 = vector.load %arg8[%c0_13, %c0_14] : memref<1x16xf32, #tpu.memory_space<vmem>>, vector<1x16xf32>
    %15 = vector.extract_strided_slice %6 {offsets = [0, 0], sizes = [8, 32], strides = [1, 1]} : vector<16x64xf32> to vector<8x32xf32>
    %16 = vector.extract_strided_slice %6 {offsets = [0, 32], sizes = [8, 32], strides = [1, 1]} : vector<16x64xf32> to vector<8x32xf32>
    %c0_15 = arith.constant 0 : index
    %c0_16 = arith.constant 0 : index
    %c0_17 = arith.constant 0 : index
    %17 = vector.load %arg3[%c0_15, %c0_16, %c0_17] : memref<2x1x8xf32, #tpu.memory_space<vmem>>, vector<1x1x8xf32>
    %18 = vector.shape_cast %17 : vector<1x1x8xf32> to vector<1x8xf32>
    %cst_18 = arith.constant 0.000000e+00 : f32
    %19 = vector.broadcast %cst_18 : f32 to vector<8x8xf32>
    %20 = vector.extract_strided_slice %15 {offsets = [0, 0], sizes = [8, 16], strides = [1, 1]} : vector<8x32xf32> to vector<8x16xf32>
    %21 = vector.extract_strided_slice %16 {offsets = [0, 0], sizes = [8, 16], strides = [1, 1]} : vector<8x32xf32> to vector<8x16xf32>
    %cst_19 = arith.constant dense<0.000000e+00> : vector<8x8xf32>
    %22 = tpu.matmul %20, %21, %cst_19 {dimension_numbers = #tpu.dot_dimension_numbers<[1], [1], [0], [0], [0, 0, 1, 0], [], []>} : vector<8x16xf32>, vector<8x16xf32>, vector<8x8xf32> -> vector<8x8xf32>
    %23 = vector.broadcast %18 : vector<1x8xf32> to vector<8x8xf32>
    %24 = arith.addf %22, %23 : vector<8x8xf32>
    %cst_20 = arith.constant dense<0xFF800000> : vector<8xf32>
    %25 = vector.multi_reduction <maximumf>, %24, %cst_20 [1] : vector<8x8xf32> to vector<8xf32>
    %26 = vector.shape_cast %25 : vector<8xf32> to vector<8x1xf32>
    %27 = vector.broadcast %26 : vector<8x1xf32> to vector<8x8xf32>
    %28 = arith.subf %24, %27 : vector<8x8xf32>
    %29 = math.exp %28 : vector<8x8xf32>
    %cst_21 = arith.constant dense<0.000000e+00> : vector<8xf32>
    %30 = vector.multi_reduction <add>, %29, %cst_21 [1] : vector<8x8xf32> to vector<8xf32>
    %31 = vector.shape_cast %30 : vector<8xf32> to vector<8x1xf32>
    %cst_22 = arith.constant 2.000000e+00 : f32
    %32 = vector.broadcast %cst_22 : f32 to vector<8x1xf32>
    %33 = arith.mulf %31, %32 : vector<8x1xf32>
    %34 = tpu.reciprocal %33 {approx = true} : vector<8x1xf32> -> vector<8x1xf32>
    %35 = vector.broadcast %34 : vector<8x1xf32> to vector<8x8xf32>
    %36 = arith.mulf %29, %35 : vector<8x8xf32>
    %37 = arith.addf %19, %36 : vector<8x8xf32>
    %38 = vector.extract_strided_slice %15 {offsets = [0, 16], sizes = [8, 16], strides = [1, 1]} : vector<8x32xf32> to vector<8x16xf32>
    %39 = vector.extract_strided_slice %16 {offsets = [0, 16], sizes = [8, 16], strides = [1, 1]} : vector<8x32xf32> to vector<8x16xf32>
    %cst_23 = arith.constant dense<0.000000e+00> : vector<8x8xf32>
    %40 = tpu.matmul %38, %39, %cst_23 {dimension_numbers = #tpu.dot_dimension_numbers<[1], [1], [0], [0], [0, 0, 1, 0], [], []>} : vector<8x16xf32>, vector<8x16xf32>, vector<8x8xf32> -> vector<8x8xf32>
    %41 = vector.broadcast %18 : vector<1x8xf32> to vector<8x8xf32>
    %42 = arith.addf %40, %41 : vector<8x8xf32>
    %cst_24 = arith.constant dense<0xFF800000> : vector<8xf32>
    %43 = vector.multi_reduction <maximumf>, %42, %cst_24 [1] : vector<8x8xf32> to vector<8xf32>
    %44 = vector.shape_cast %43 : vector<8xf32> to vector<8x1xf32>
    %45 = vector.broadcast %44 : vector<8x1xf32> to vector<8x8xf32>
    %46 = arith.subf %42, %45 : vector<8x8xf32>
    %47 = math.exp %46 : vector<8x8xf32>
    %cst_25 = arith.constant dense<0.000000e+00> : vector<8xf32>
    %48 = vector.multi_reduction <add>, %47, %cst_25 [1] : vector<8x8xf32> to vector<8xf32>
    %49 = vector.shape_cast %48 : vector<8xf32> to vector<8x1xf32>
    %cst_26 = arith.constant 2.000000e+00 : f32
    %50 = vector.broadcast %cst_26 : f32 to vector<8x1xf32>
    %51 = arith.mulf %49, %50 : vector<8x1xf32>
    %52 = tpu.reciprocal %51 {approx = true} : vector<8x1xf32> -> vector<8x1xf32>
    %53 = vector.broadcast %52 : vector<8x1xf32> to vector<8x8xf32>
    %54 = arith.mulf %47, %53 : vector<8x8xf32>
    %55 = arith.addf %37, %54 : vector<8x8xf32>
    %c0_27 = arith.constant 0 : index
    %c0_28 = arith.constant 0 : index
    %c0_29 = arith.constant 0 : index
    %56 = vector.load %arg4[%c0_27, %c0_28, %c0_29] : memref<2x8x1xf32, #tpu.memory_space<vmem>>, vector<1x8x1xf32>
    %57 = vector.shape_cast %56 : vector<1x8x1xf32> to vector<8x1xf32>
    %cst_30 = arith.constant 1.000000e+00 : f32
    %58 = vector.broadcast %cst_30 : f32 to vector<8x8xf32>
    %59 = arith.select %11, %58, %55 : vector<8x8xi1>, vector<8x8xf32>
    %60 = vector.broadcast %57 : vector<8x1xf32> to vector<8x8xf32>
    %61 = arith.mulf %59, %60 : vector<8x8xf32>
    %cst_31 = arith.constant dense<0.000000e+00> : vector<8xf32>
    %62 = vector.multi_reduction <add>, %61, %cst_31 [1] : vector<8x8xf32> to vector<8xf32>
    %63 = vector.shape_cast %62 : vector<8xf32> to vector<8x1xf32>
    %cst_32 = arith.constant 1.000000e+00 : f32
    %64 = vector.broadcast %cst_32 : f32 to vector<8x1xf32>
    %65 = arith.addf %63, %64 : vector<8x1xf32>
    %66 = tpu.reciprocal %65 {approx = true} : vector<8x1xf32> -> vector<8x1xf32>
    %67 = vector.extract_strided_slice %8 {offsets = [0, 0], sizes = [8, 16], strides = [1, 1]} : vector<16x16xf32> to vector<8x16xf32>
    %cst_33 = arith.constant dense<0.000000e+00> : vector<8x16xf32>
    %68 = tpu.matmul %61, %67, %cst_33 {dimension_numbers = #tpu.dot_dimension_numbers<[1], [0], [0], [1], [0, 0, 1, 1], [], []>} : vector<8x8xf32>, vector<8x16xf32>, vector<8x16xf32> -> vector<8x16xf32>
    %69 = vector.broadcast %13 : vector<1x16xf32> to vector<8x16xf32>
    %70 = arith.addf %68, %69 : vector<8x16xf32>
    %71 = vector.broadcast %66 : vector<8x1xf32> to vector<8x16xf32>
    %72 = arith.mulf %70, %71 : vector<8x16xf32>
    %cst_34 = arith.constant 0.000000e+00 : f32
    %73 = vector.broadcast %cst_34 : f32 to vector<8x16xf32>
    %74 = arith.maximumf %72, %73 : vector<8x16xf32>
    %cst_35 = arith.constant dense<0.000000e+00> : vector<8x16xf32>
    %75 = tpu.matmul %61, %74, %cst_35 {dimension_numbers = #tpu.dot_dimension_numbers<[1], [0], [0], [1], [0, 0, 1, 1], [], []>} : vector<8x8xf32>, vector<8x16xf32>, vector<8x16xf32> -> vector<8x16xf32>
    %cst_36 = arith.constant dense<0.000000e+00> : vector<8x16xf32>
    %76 = tpu.matmul %75, %12, %cst_36 {dimension_numbers = #tpu.dot_dimension_numbers<[1], [0], [0], [1], [0, 0, 1, 1], [], []>} : vector<8x16xf32>, vector<16x16xf32>, vector<8x16xf32> -> vector<8x16xf32>
    %77 = vector.broadcast %14 : vector<1x16xf32> to vector<8x16xf32>
    %78 = arith.addf %76, %77 : vector<8x16xf32>
    %79 = vector.broadcast %66 : vector<8x1xf32> to vector<8x16xf32>
    %80 = arith.mulf %78, %79 : vector<8x16xf32>
    %cst_37 = arith.constant 0.000000e+00 : f32
    %81 = vector.broadcast %cst_37 : f32 to vector<8x16xf32>
    %82 = arith.maximumf %80, %81 : vector<8x16xf32>
    %c0_38 = arith.constant 0 : index
    %c0_39 = arith.constant 0 : index
    %c0_40 = arith.constant 0 : index
    %83 = vector.load %arg9[%c0_38, %c0_39, %c0_40] : memref<2x8x16xf32, #tpu.memory_space<vmem>>, vector<1x8x16xf32>
    %84 = vector.shape_cast %83 : vector<1x8x16xf32> to vector<8x16xf32>
    %85 = vector.shape_cast %82 : vector<8x16xf32> to vector<1x8x16xf32>
    tpu.vector_store %arg9[%c0_38, %c0_39, %c0_40], %85 {strides = array<i32>} : memref<2x8x16xf32, #tpu.memory_space<vmem>>, vector<1x8x16xf32>,
    %86 = vector.extract_strided_slice %6 {offsets = [8, 0], sizes = [8, 32], strides = [1, 1]} : vector<16x64xf32> to vector<8x32xf32>
    %87 = vector.extract_strided_slice %6 {offsets = [8, 32], sizes = [8, 32], strides = [1, 1]} : vector<16x64xf32> to vector<8x32xf32>
    %c1 = arith.constant 1 : index
    %c0_41 = arith.constant 0 : index
    %c0_42 = arith.constant 0 : index
    %88 = vector.load %arg3[%c1, %c0_41, %c0_42] : memref<2x1x8xf32, #tpu.memory_space<vmem>>, vector<1x1x8xf32>
    %89 = vector.shape_cast %88 : vector<1x1x8xf32> to vector<1x8xf32>
    %cst_43 = arith.constant 0.000000e+00 : f32
    %90 = vector.broadcast %cst_43 : f32 to vector<8x8xf32>
    %91 = vector.extract_strided_slice %86 {offsets = [0, 0], sizes = [8, 16], strides = [1, 1]} : vector<8x32xf32> to vector<8x16xf32>
    %92 = vector.extract_strided_slice %87 {offsets = [0, 0], sizes = [8, 16], strides = [1, 1]} : vector<8x32xf32> to vector<8x16xf32>
    %cst_44 = arith.constant dense<0.000000e+00> : vector<8x8xf32>
    %93 = tpu.matmul %91, %92, %cst_44 {dimension_numbers = #tpu.dot_dimension_numbers<[1], [1], [0], [0], [0, 0, 1, 0], [], []>} : vector<8x16xf32>, vector<8x16xf32>, vector<8x8xf32> -> vector<8x8xf32>
    %94 = vector.broadcast %89 : vector<1x8xf32> to vector<8x8xf32>
    %95 = arith.addf %93, %94 : vector<8x8xf32>
    %cst_45 = arith.constant dense<0xFF800000> : vector<8xf32>
    %96 = vector.multi_reduction <maximumf>, %95, %cst_45 [1] : vector<8x8xf32> to vector<8xf32>
    %97 = vector.shape_cast %96 : vector<8xf32> to vector<8x1xf32>
    %98 = vector.broadcast %97 : vector<8x1xf32> to vector<8x8xf32>
    %99 = arith.subf %95, %98 : vector<8x8xf32>
    %100 = math.exp %99 : vector<8x8xf32>
    %cst_46 = arith.constant dense<0.000000e+00> : vector<8xf32>
    %101 = vector.multi_reduction <add>, %100, %cst_46 [1] : vector<8x8xf32> to vector<8xf32>
    %102 = vector.shape_cast %101 : vector<8xf32> to vector<8x1xf32>
    %cst_47 = arith.constant 2.000000e+00 : f32
    %103 = vector.broadcast %cst_47 : f32 to vector<8x1xf32>
    %104 = arith.mulf %102, %103 : vector<8x1xf32>
    %105 = tpu.reciprocal %104 {approx = true} : vector<8x1xf32> -> vector<8x1xf32>
    %106 = vector.broadcast %105 : vector<8x1xf32> to vector<8x8xf32>
    %107 = arith.mulf %100, %106 : vector<8x8xf32>
    %108 = arith.addf %90, %107 : vector<8x8xf32>
    %109 = vector.extract_strided_slice %86 {offsets = [0, 16], sizes = [8, 16], strides = [1, 1]} : vector<8x32xf32> to vector<8x16xf32>
    %110 = vector.extract_strided_slice %87 {offsets = [0, 16], sizes = [8, 16], strides = [1, 1]} : vector<8x32xf32> to vector<8x16xf32>
    %cst_48 = arith.constant dense<0.000000e+00> : vector<8x8xf32>
    %111 = tpu.matmul %109, %110, %cst_48 {dimension_numbers = #tpu.dot_dimension_numbers<[1], [1], [0], [0], [0, 0, 1, 0], [], []>} : vector<8x16xf32>, vector<8x16xf32>, vector<8x8xf32> -> vector<8x8xf32>
    %112 = vector.broadcast %89 : vector<1x8xf32> to vector<8x8xf32>
    %113 = arith.addf %111, %112 : vector<8x8xf32>
    %cst_49 = arith.constant dense<0xFF800000> : vector<8xf32>
    %114 = vector.multi_reduction <maximumf>, %113, %cst_49 [1] : vector<8x8xf32> to vector<8xf32>
    %115 = vector.shape_cast %114 : vector<8xf32> to vector<8x1xf32>
    %116 = vector.broadcast %115 : vector<8x1xf32> to vector<8x8xf32>
    %117 = arith.subf %113, %116 : vector<8x8xf32>
    %118 = math.exp %117 : vector<8x8xf32>
    %cst_50 = arith.constant dense<0.000000e+00> : vector<8xf32>
    %119 = vector.multi_reduction <add>, %118, %cst_50 [1] : vector<8x8xf32> to vector<8xf32>
    %120 = vector.shape_cast %119 : vector<8xf32> to vector<8x1xf32>
    %cst_51 = arith.constant 2.000000e+00 : f32
    %121 = vector.broadcast %cst_51 : f32 to vector<8x1xf32>
    %122 = arith.mulf %120, %121 : vector<8x1xf32>
    %123 = tpu.reciprocal %122 {approx = true} : vector<8x1xf32> -> vector<8x1xf32>
    %124 = vector.broadcast %123 : vector<8x1xf32> to vector<8x8xf32>
    %125 = arith.mulf %118, %124 : vector<8x8xf32>
    %126 = arith.addf %108, %125 : vector<8x8xf32>
    %c1_52 = arith.constant 1 : index
    %c0_53 = arith.constant 0 : index
    %c0_54 = arith.constant 0 : index
    %127 = vector.load %arg4[%c1_52, %c0_53, %c0_54] : memref<2x8x1xf32, #tpu.memory_space<vmem>>, vector<1x8x1xf32>
    %128 = vector.shape_cast %127 : vector<1x8x1xf32> to vector<8x1xf32>
    %cst_55 = arith.constant 1.000000e+00 : f32
    %129 = vector.broadcast %cst_55 : f32 to vector<8x8xf32>
    %130 = arith.select %11, %129, %126 : vector<8x8xi1>, vector<8x8xf32>
    %131 = vector.broadcast %128 : vector<8x1xf32> to vector<8x8xf32>
    %132 = arith.mulf %130, %131 : vector<8x8xf32>
    %cst_56 = arith.constant dense<0.000000e+00> : vector<8xf32>
    %133 = vector.multi_reduction <add>, %132, %cst_56 [1] : vector<8x8xf32> to vector<8xf32>
    %134 = vector.shape_cast %133 : vector<8xf32> to vector<8x1xf32>
    %cst_57 = arith.constant 1.000000e+00 : f32
    %135 = vector.broadcast %cst_57 : f32 to vector<8x1xf32>
    %136 = arith.addf %134, %135 : vector<8x1xf32>
    %137 = tpu.reciprocal %136 {approx = true} : vector<8x1xf32> -> vector<8x1xf32>
    %138 = vector.extract_strided_slice %8 {offsets = [8, 0], sizes = [8, 16], strides = [1, 1]} : vector<16x16xf32> to vector<8x16xf32>
    %cst_58 = arith.constant dense<0.000000e+00> : vector<8x16xf32>
    %139 = tpu.matmul %132, %138, %cst_58 {dimension_numbers = #tpu.dot_dimension_numbers<[1], [0], [0], [1], [0, 0, 1, 1], [], []>} : vector<8x8xf32>, vector<8x16xf32>, vector<8x16xf32> -> vector<8x16xf32>
    %140 = vector.broadcast %13 : vector<1x16xf32> to vector<8x16xf32>
    %141 = arith.addf %139, %140 : vector<8x16xf32>
    %142 = vector.broadcast %137 : vector<8x1xf32> to vector<8x16xf32>
    %143 = arith.mulf %141, %142 : vector<8x16xf32>
    %cst_59 = arith.constant 0.000000e+00 : f32
    %144 = vector.broadcast %cst_59 : f32 to vector<8x16xf32>
    %145 = arith.maximumf %143, %144 : vector<8x16xf32>
    %cst_60 = arith.constant dense<0.000000e+00> : vector<8x16xf32>
    %146 = tpu.matmul %132, %145, %cst_60 {dimension_numbers = #tpu.dot_dimension_numbers<[1], [0], [0], [1], [0, 0, 1, 1], [], []>} : vector<8x8xf32>, vector<8x16xf32>, vector<8x16xf32> -> vector<8x16xf32>
    %cst_61 = arith.constant dense<0.000000e+00> : vector<8x16xf32>
    %147 = tpu.matmul %146, %12, %cst_61 {dimension_numbers = #tpu.dot_dimension_numbers<[1], [0], [0], [1], [0, 0, 1, 1], [], []>} : vector<8x16xf32>, vector<16x16xf32>, vector<8x16xf32> -> vector<8x16xf32>
    %148 = vector.broadcast %14 : vector<1x16xf32> to vector<8x16xf32>
    %149 = arith.addf %147, %148 : vector<8x16xf32>
    %150 = vector.broadcast %137 : vector<8x1xf32> to vector<8x16xf32>
    %151 = arith.mulf %149, %150 : vector<8x16xf32>
    %cst_62 = arith.constant 0.000000e+00 : f32
    %152 = vector.broadcast %cst_62 : f32 to vector<8x16xf32>
    %153 = arith.maximumf %151, %152 : vector<8x16xf32>
    %c1_63 = arith.constant 1 : index
    %c0_64 = arith.constant 0 : index
    %c0_65 = arith.constant 0 : index
    %154 = vector.load %arg9[%c1_63, %c0_64, %c0_65] : memref<2x8x16xf32, #tpu.memory_space<vmem>>, vector<1x8x16xf32>
    %155 = vector.shape_cast %154 : vector<1x8x16xf32> to vector<8x16xf32>
    %156 = vector.shape_cast %153 : vector<8x16xf32> to vector<1x8x16xf32>
    tpu.vector_store %arg9[%c1_63, %c0_64, %c0_65], %156 {strides = array<i32>} : memref<2x8x16xf32, #tpu.memory_space<vmem>>, vector<1x8x16xf32>,
    return
  }
}

</mosaic_0001>

<llo_original>
// kernel: custom-call.6
$region0: #{custom-call.6}
  %s0 = inlined_call_operand.vmem [shape: f32[2,16], index: 0, kind: output, shape index: {}]

// kernel: gcn_forward.1
$region0: #{gcn_forward.1}
  #allocation0 [shape = 'u32[]', space=smem, size = 0x4, offset = 0x4, fixed_abs, tag = 'smem constant byte address 0x4 - core index']
  #allocation1 [shape = 'u32[144,128]{1,0:T(1,128)}', space=vmem, size = 0x12000, scoped, tag = 'internal scratch']
  %s0 = inlined_call_operand.vmem [shape: f32[2,8,32], index: 0, kind: input, shape index: {}]
  %s1 = inlined_call_operand.vmem [shape: f32[32,64], index: 1, kind: input, shape index: {}]
  %s2 = inlined_call_operand.vmem [shape: f32[1,64], index: 2, kind: input, shape index: {}]
  %s3 = inlined_call_operand.vmem [shape: f32[2,1,8], index: 3, kind: input, shape index: {}]
  %s4 = inlined_call_operand.vmem [shape: f32[2,8,1], index: 4, kind: input, shape index: {}]
  %s5 = inlined_call_operand.vmem [shape: f32[32,16], index: 5, kind: input, shape index: {}]
  %s6 = inlined_call_operand.vmem [shape: f32[1,16], index: 6, kind: input, shape index: {}]
  %s7 = inlined_call_operand.vmem [shape: f32[16,16], index: 7, kind: input, shape index: {}]
  %s8 = inlined_call_operand.vmem [shape: f32[1,16], index: 8, kind: input, shape index: {}]
  %s9 = inlined_call_operand.hbm [shape: f32[2,8,16], index: 9, kind: output, shape index: {}]
  %s10 = sld [smem:[#allocation0]]
  $region46: #{gcn_forward.1} parent=0
    _
  %s12 = ssub.s32 1, %s10
  %s13 = scalar_select 0, %s12, %s10
  $region1: #{gcn_forward.1} parent=0
    #allocation2 [shape = 'u8[8192]{0}', space=vmem, size = 0x2000, scoped, tag = 'output window, operand 0, single buffered']
    #allocation3 [shape = 's32[1]{0}', space=sflag, size = 0x4, scoped, tag = 'scoped memory for gcn_forward.1']
    %14 = vsyncpa [#allocation3], 0
    // Predicated region
    $region2: #{gcn_forward.1} parent=1 // pred_check
      _
    $region3: #{gcn_forward.1} parent=1 // pred_check_branch
      %16 = sbr.rel (0) target = $region5
    $region4: #{gcn_forward.1} parent=1 // pred_region
      _
    $region5: #{gcn_forward.1} parent=1 // pred_fallthru
      _
    // Predicated region
    $region6: #{gcn_forward.1} parent=1 // pred_check
      _
    $region7: #{gcn_forward.1} parent=1 // pred_check_branch
      %18 = sbr.rel (0) target = $region9
    $region8: #{gcn_forward.1} parent=1 // pred_region
      _
    $region9: #{gcn_forward.1} parent=1 // pred_fallthru
      _
    // Predicated region
    $region10: #{gcn_forward.1} parent=1 // pred_check
      _
    $region11: #{gcn_forward.1} parent=1 // pred_check_branch
      %20 = sbr.rel (0) target = $region13
    $region12: #{gcn_forward.1} parent=1 // pred_region
      _
    $region13: #{gcn_forward.1} parent=1 // pred_fallthru
      _
    // Predicated region
    $region14: #{gcn_forward.1} parent=1 // pred_check
      _
    $region15: #{gcn_forward.1} parent=1 // pred_check_branch
      %22 = sbr.rel (0) target = $region17
    $region16: #{gcn_forward.1} parent=1 // pred_region
      _
    $region17: #{gcn_forward.1} parent=1 // pred_fallthru
      _
    // Predicated region
    $region18: #{gcn_forward.1} parent=1 // pred_check
      _
    $region19: #{gcn_forward.1} parent=1 // pred_check_branch
      %24 = sbr.rel (0) target = $region21
    $region20: #{gcn_forward.1} parent=1 // pred_region
      _
    $region21: #{gcn_forward.1} parent=1 // pred_fallthru
      _
    // Predicated region
    $region22: #{gcn_forward.1} parent=1 // pred_check
      _
    $region23: #{gcn_forward.1} parent=1 // pred_check_branch
      %26 = sbr.rel (0) target = $region25
    $region24: #{gcn_forward.1} parent=1 // pred_region
      _
    $region25: #{gcn_forward.1} parent=1 // pred_fallthru
      _
    // Predicated region
    $region26: #{gcn_forward.1} parent=1 // pred_check
      _
    $region27: #{gcn_forward.1} parent=1 // pred_check_branch
      %28 = sbr.rel (0) target = $region29
    $region28: #{gcn_forward.1} parent=1 // pred_region
      _
    $region29: #{gcn_forward.1} parent=1 // pred_fallthru
      _
    // Predicated region
    $region30: #{gcn_forward.1} parent=1 // pred_check
      _
    $region31: #{gcn_forward.1} parent=1 // pred_check_branch
      %30 = sbr.rel (0) target = $region33
    $region32: #{gcn_forward.1} parent=1 // pred_region
      _
    $region33: #{gcn_forward.1} parent=1 // pred_fallthru
      _
    // Predicated region
    $region34: #{gcn_forward.1} parent=1 // pred_check
      _
    $region35: #{gcn_forward.1} parent=1 // pred_check_branch
      %32 = sbr.rel (0) target = $region37
    $region36: #{gcn_forward.1} parent=1 // pred_region
      _
    $region37: #{gcn_forward.1} parent=1 // pred_fallthru
      _
    %v33 = vld [vmem:[%s0] sm:$0xff]
    %v34 = vld [vmem:[%s0 + $0x8] sm:$0xff]
    %v35 = vld [vmem:[%s1] sm:$0xff]
    %v36 = vld [vmem:[%s1 + $0x8] sm:$0xff]
    %v37 = vld [vmem:[%s1 + $0x10] sm:$0xff]
    %v38 = vld [vmem:[%s1 + $0x18] sm:$0xff]
    %v39 = vld [vmem:[%s2] sm:$0x1]
    %v41 = vlaneseq
    %v42 = vshrl.u32 %v41, 7
    %v43 = vsub.s32 0, %v42
    %v44 = vrot.slane %v39, %v43
    %vm46 = vcmask 261120
    %v48 = vsel %vm46, %v33, 0
    %v51 = vsel %vm46, %v34, 0
    %53 = vmatprep.subr.mxu0 0.0
    %54 = vmatpush1.msra.mxu0 %v35
    %55 = vmatprep.subr.mxu0 0.0
    %56 = vmatpush1.msra.mxu0 %v36
    %57 = vmatprep.subr.mxu0 0.0
    %58 = vmatpush1.msra.mxu0 %v37
    %59 = vmatprep.subr.mxu0 0.0
    %60 = vmatpush1.msra.mxu0 %v38
    %61 = vmatprep.subr.mxu0 0.0
    %62 = vmatpush1.msra.mxu0 0.0
    %63 = vmatprep.subr.mxu0 0.0
    %64 = vmatpush1.msra.mxu0 0.0
    %65 = vmatprep.subr.mxu0 0.0
    %66 = vmatpush1.msra.mxu0 0.0
    %67 = vmatprep.subr.mxu0 0.0
    %68 = vmatpush1.msra.mxu0 0.0
    %69 = vmatprep.subr.mxu0 0.0
    %70 = vmatpush1.msra.mxu0 0.0
    %71 = vmatprep.subr.mxu0 0.0
    %72 = vmatpush1.msra.mxu0 0.0
    %73 = vmatprep.subr.mxu0 0.0
    %74 = vmatpush1.msra.mxu0 0.0
    %75 = vmatprep.subr.mxu0 0.0
    %76 = vmatpush1.msra.mxu0 0.0
    %77 = vmatprep.subr.mxu0 0.0
    %78 = vmatpush1.msra.mxu0 0.0
    %79 = vmatprep.subr.mxu0 0.0
    %80 = vmatpush1.msra.mxu0 0.0
    %81 = vmatprep.subr.mxu0 0.0
    %82 = vmatpush1.msra.mxu0 0.0
    %83 = vmatprep.subr.mxu0 0.0
    %84 = vmatpush1.msra.mxu0 0.0
    %85 = vmatprep.subr.mxu0 0.0
    %86 = vmatpush1.msra.mxu0 0.0
    %87 = vmatprep.subr.mxu0 0.0
    %88 = vmatpush1.msra.mxu0 0.0
    %89 = vmatprep.subr.mxu0 0.0
    %90 = vmatpush1.msra.mxu0 0.0
    %91 = vmatprep.subr.mxu0 0.0
    %92 = vmatpush1.msra.mxu0 0.0
    %93 = vmatprep.subr.mxu0 0.0
    %94 = vmatpush1.msra.mxu0 0.0
    %95 = vmatprep.subr.mxu0 0.0
    %96 = vmatpush1.msra.mxu0 0.0
    %97 = vmatprep.subr.mxu0 0.0
    %98 = vmatpush1.msra.mxu0 0.0
    %99 = vmatprep.subr.mxu0 0.0
    %100 = vmatpush1.msra.mxu0 0.0
    %101 = vmatprep.subr.mxu0 0.0
    %102 = vmatpush1.msra.mxu0 0.0
    %103 = vmatprep.subr.mxu0 0.0
    %104 = vmatpush1.msra.mxu0 0.0
    %105 = vmatprep.subr.mxu0 0.0
    %106 = vmatpush1.msra.mxu0 0.0
    %107 = vmatprep.subr.mxu0 0.0
    %108 = vmatpush1.msra.mxu0 0.0
    %109 = vmatprep.subr.mxu0 0.0
    %110 = vmatpush1.msra.mxu0 0.0
    %111 = vmatprep.subr.mxu0 0.0
    %112 = vmatpush1.msra.mxu0 0.0
    %113 = vmatprep.subr.mxu0 0.0
    %114 = vmatpush1.msra.mxu0 0.0
    %115 = vmatprep.subr.mxu0 0.0
    %116 = vmatpush1.msra.mxu0 0.0
    %117 = vmatprep.mubr.f32.mxu0 0.0
    %118 = vmatmul.mubr.f32.gmra.mrb[0].mxu0 %v48
    %v119 = vpop.f32.mrb[0].mxu0
    %v120 = vadd.f32 %v44, %v119
    %v121 = vpop.f32.mrb[0].mxu0
    %122 = vmatprep.mubr.f32.mxu0 0.0
    %123 = vmatmul.mubr.f32.gmra.mrb[0].mxu0 %v51
    %v124 = vpop.f32.mrb[0].mxu0
    %v125 = vadd.f32 %v44, %v124
    %v126 = vpop.f32.mrb[0].mxu0
    %127 = vdwg.mxu0
    %v128 = vld [vmem:[%s5] sm:$0xff]
    %v129 = vld [vmem:[%s5 + $0x8] sm:$0xff]
    %v130 = vld [vmem:[%s5 + $0x10] sm:$0xff]
    %v131 = vld [vmem:[%s5 + $0x18] sm:$0xff]
    %132 = vmatprep.subr.mxu0 0.0
    %133 = vmatpush1.msra.mxu0 %v128
    %134 = vmatprep.subr.mxu0 0.0
    %135 = vmatpush1.msra.mxu0 %v129
    %136 = vmatprep.subr.mxu0 0.0
    %137 = vmatpush1.msra.mxu0 %v130
    %138 = vmatprep.subr.mxu0 0.0
    %139 = vmatpush1.msra.mxu0 %v131
    %140 = vmatprep.subr.mxu0 0.0
    %141 = vmatpush1.msra.mxu0 0.0
    %142 = vmatprep.subr.mxu0 0.0
    %143 = vmatpush1.msra.mxu0 0.0
    %144 = vmatprep.subr.mxu0 0.0
    %145 = vmatpush1.msra.mxu0 0.0
    %146 = vmatprep.subr.mxu0 0.0
    %147 = vmatpush1.msra.mxu0 0.0
    %148 = vmatprep.subr.mxu0 0.0
    %149 = vmatpush1.msra.mxu0 0.0
    %150 = vmatprep.subr.mxu0 0.0
    %151 = vmatpush1.msra.mxu0 0.0
    %152 = vmatprep.subr.mxu0 0.0
    %153 = vmatpush1.msra.mxu0 0.0
    %154 = vmatprep.subr.mxu0 0.0
    %155 = vmatpush1.msra.mxu0 0.0
    %156 = vmatprep.subr.mxu0 0.0
    %157 = vmatpush1.msra.mxu0 0.0
    %158 = vmatprep.subr.mxu0 0.0
    %159 = vmatpush1.msra.mxu0 0.0
    %160 = vmatprep.subr.mxu0 0.0
    %161 = vmatpush1.msra.mxu0 0.0
    %162 = vmatprep.subr.mxu0 0.0
    %163 = vmatpush1.msra.mxu0 0.0
    %164 = vmatprep.subr.mxu0 0.0
    %165 = vmatpush1.msra.mxu0 0.0
    %166 = vmatprep.subr.mxu0 0.0
    %167 = vmatpush1.msra.mxu0 0.0
    %168 = vmatprep.subr.mxu0 0.0
    %169 = vmatpush1.msra.mxu0 0.0
    %170 = vmatprep.subr.mxu0 0.0
    %171 = vmatpush1.msra.mxu0 0.0
    %172 = vmatprep.subr.mxu0 0.0
    %173 = vmatpush1.msra.mxu0 0.0
    %174 = vmatprep.subr.mxu0 0.0
    %175 = vmatpush1.msra.mxu0 0.0
    %176 = vmatprep.subr.mxu0 0.0
    %177 = vmatpush1.msra.mxu0 0.0
    %178 = vmatprep.subr.mxu0 0.0
    %179 = vmatpush1.msra.mxu0 0.0
    %180 = vmatprep.subr.mxu0 0.0
    %181 = vmatpush1.msra.mxu0 0.0
    %182 = vmatprep.subr.mxu0 0.0
    %183 = vmatpush1.msra.mxu0 0.0
    %184 = vmatprep.subr.mxu0 0.0
    %185 = vmatpush1.msra.mxu0 0.0
    %186 = vmatprep.subr.mxu0 0.0
    %187 = vmatpush1.msra.mxu0 0.0
    %188 = vmatprep.subr.mxu0 0.0
    %189 = vmatpush1.msra.mxu0 0.0
    %190 = vmatprep.subr.mxu0 0.0
    %191 = vmatpush1.msra.mxu0 0.0
    %192 = vmatprep.subr.mxu0 0.0
    %193 = vmatpush1.msra.mxu0 0.0
    %194 = vmatprep.subr.mxu0 0.0
    %195 = vmatpush1.msra.mxu0 0.0
    %196 = vmatprep.mubr.f32.mxu0 0.0
    %197 = vmatmul.mubr.f32.gmra.mrb[0].mxu0 %v48
    %v198 = vpop.f32.mrb[0].mxu0
    %v199 = vadd.f32 0.0, %v198
    %v200 = vpop.f32.mrb[0].mxu0
    %201 = vmatprep.mubr.f32.mxu0 0.0
    %202 = vmatmul.mubr.f32.gmra.mrb[0].mxu0 %v51
    %v203 = vpop.f32.mrb[0].mxu0
    %v204 = vadd.f32 0.0, %v203
    %v205 = vpop.f32.mrb[0].mxu0
    %206 = vdwg.mxu0
    %v207 = vlaneseq
    %v208 = vshrl.u32 %v207, 7
    %v209 = vlaneseq
    %v210 = vand.u32 %v209, 127
    %vm211 = vcmp.eq.s32.totalorder %v208, %v210
    %v212 = vld [vmem:[%s7] sm:$0xff]
    %v213 = vld [vmem:[%s7 + $0x8] sm:$0xff]
    %v214 = vld [vmem:[%s6] sm:$0x1]
    %v215 = vld [vmem:[%s8] sm:$0x1]
    %v216 = vld [vmem:[%s3] sm:$0x1]
    %v218 = vlaneseq
    %v219 = vshrl.u32 %v218, 7
    %v220 = vsub.s32 0, %v219
    %v221 = vrot.slane %v216, %v220
    %224 = vrot.lane.b32.xlu0 %v120, 96
    %v225 = vpop.permute.xlu0 %224
    %vm226 = vcmask 130048
    %v227 = vsel %vm226, %v120, 0
    %v229 = vsel %vm226, %v225, 0
    %231 = vmatprep.subr.mxu0 0.0
    %232 = vmatpush1.xpose.msra.mxu0 %v229
    %233 = vmatprep.subr.mxu0 0.0
    %234 = vmatpush1.xpose.msra.mxu0 0.0
    %235 = vmatprep.subr.mxu0 0.0
    %236 = vmatpush1.xpose.msra.mxu0 0.0
    %237 = vmatprep.subr.mxu0 0.0
    %238 = vmatpush1.xpose.msra.mxu0 0.0
    %239 = vmatprep.subr.mxu0 0.0
    %240 = vmatpush1.xpose.msra.mxu0 0.0
    %241 = vmatprep.subr.mxu0 0.0
    %242 = vmatpush1.xpose.msra.mxu0 0.0
    %243 = vmatprep.subr.mxu0 0.0
    %244 = vmatpush1.xpose.msra.mxu0 0.0
    %245 = vmatprep.subr.mxu0 0.0
    %246 = vmatpush1.xpose.msra.mxu0 0.0
    %247 = vmatprep.subr.mxu0 0.0
    %248 = vmatpush1.xpose.msra.mxu0 0.0
    %249 = vmatprep.subr.mxu0 0.0
    %250 = vmatpush1.xpose.msra.mxu0 0.0
    %251 = vmatprep.subr.mxu0 0.0
    %252 = vmatpush1.xpose.msra.mxu0 0.0
    %253 = vmatprep.subr.mxu0 0.0
    %254 = vmatpush1.xpose.msra.mxu0 0.0
    %255 = vmatprep.subr.mxu0 0.0
    %256 = vmatpush1.xpose.msra.mxu0 0.0
    %257 = vmatprep.subr.mxu0 0.0
    %258 = vmatpush1.xpose.msra.mxu0 0.0
    %259 = vmatprep.subr.mxu0 0.0
    %260 = vmatpush1.xpose.msra.mxu0 0.0
    %261 = vmatprep.subr.mxu0 0.0
    %262 = vmatpush1.xpose.msra.mxu0 0.0
    %263 = vmatprep.subr.mxu0 0.0
    %264 = vmatpush1.xpose.msra.mxu0 0.0
    %265 = vmatprep.subr.mxu0 0.0
    %266 = vmatpush1.xpose.msra.mxu0 0.0
    %267 = vmatprep.subr.mxu0 0.0
    %268 = vmatpush1.xpose.msra.mxu0 0.0
    %269 = vmatprep.subr.mxu0 0.0
    %270 = vmatpush1.xpose.msra.mxu0 0.0
    %271 = vmatprep.subr.mxu0 0.0
    %272 = vmatpush1.xpose.msra.mxu0 0.0
    %273 = vmatprep.subr.mxu0 0.0
    %274 = vmatpush1.xpose.msra.mxu0 0.0
    %275 = vmatprep.subr.mxu0 0.0
    %276 = vmatpush1.xpose.msra.mxu0 0.0
    %277 = vmatprep.subr.mxu0 0.0
    %278 = vmatpush1.xpose.msra.mxu0 0.0
    %279 = vmatprep.subr.mxu0 0.0
    %280 = vmatpush1.xpose.msra.mxu0 0.0
    %281 = vmatprep.subr.mxu0 0.0
    %282 = vmatpush1.xpose.msra.mxu0 0.0
    %283 = vmatprep.subr.mxu0 0.0
    %284 = vmatpush1.xpose.msra.mxu0 0.0
    %285 = vmatprep.subr.mxu0 0.0
    %286 = vmatpush1.xpose.msra.mxu0 0.0
    %287 = vmatprep.subr.mxu0 0.0
    %288 = vmatpush1.xpose.msra.mxu0 0.0
    %289 = vmatprep.subr.mxu0 0.0
    %290 = vmatpush1.xpose.msra.mxu0 0.0
    %291 = vmatprep.subr.mxu0 0.0
    %292 = vmatpush1.xpose.msra.mxu0 0.0
    %293 = vmatprep.subr.mxu0 0.0
    %294 = vmatpush1.xpose.msra.mxu0 0.0
    %295 = vmatprep.mubr.f32.mxu0 0.0
    %296 = vmatmul.mubr.f32.gmra.mrb[0].mxu0 %v227
    %v297 = vpop.f32.mrb[0].mxu0
    %v298 = vadd.f32 %v221, %v297
    %v299 = vpop.f32.mrb[0].mxu0
    %300 = vdwg.mxu0
    %vm301 = vcmask 64512
    %v302 = vsel %vm301, %v298, -inf
    %303 = vmax.xlane.f32.xlu0 %v302
    %v304 = vpop.xlane.xlu0 %303
    %v305 = vsub.f32 %v298, %v304
    %v306 = vmul.f32 %v305, 1.442695
    %v307 = vpow.pop %v306
    %v308 = vsel %vm301, %v307, 0.0
    %309 = vadd.xlane.f32.xlu0 %v308
    %v310 = vpop.xlane.xlu0 %309
    %v311 = vmul.f32 %v310, 2.0
    %v312 = vrcp.pop %v311
    %v313 = vmul.f32 %v307, %v312
    %v314 = vadd.f32 %v313, 0.0
    %315 = vrot.lane.b32.xlu0 %v120, 112
    %v316 = vpop.permute.xlu0 %315
    %317 = vrot.lane.b32.xlu0 %v120, 80
    %v318 = vpop.permute.xlu0 %317
    %v319 = vsel %vm226, %v316, 0
    %v321 = vsel %vm226, %v318, 0
    %323 = vmatprep.subr.mxu0 0.0
    %324 = vmatpush1.xpose.msra.mxu0 %v321
    %325 = vmatprep.subr.mxu0 0.0
    %326 = vmatpush1.xpose.msra.mxu0 0.0
    %327 = vmatprep.subr.mxu0 0.0
    %328 = vmatpush1.xpose.msra.mxu0 0.0
    %329 = vmatprep.subr.mxu0 0.0
    %330 = vmatpush1.xpose.msra.mxu0 0.0
    %331 = vmatprep.subr.mxu0 0.0
    %332 = vmatpush1.xpose.msra.mxu0 0.0
    %333 = vmatprep.subr.mxu0 0.0
    %334 = vmatpush1.xpose.msra.mxu0 0.0
    %335 = vmatprep.subr.mxu0 0.0
    %336 = vmatpush1.xpose.msra.mxu0 0.0
    %337 = vmatprep.subr.mxu0 0.0
    %338 = vmatpush1.xpose.msra.mxu0 0.0
    %339 = vmatprep.subr.mxu0 0.0
    %340 = vmatpush1.xpose.msra.mxu0 0.0
    %341 = vmatprep.subr.mxu0 0.0
    %342 = vmatpush1.xpose.msra.mxu0 0.0
    %343 = vmatprep.subr.mxu0 0.0
    %344 = vmatpush1.xpose.msra.mxu0 0.0
    %345 = vmatprep.subr.mxu0 0.0
    %346 = vmatpush1.xpose.msra.mxu0 0.0
    %347 = vmatprep.subr.mxu0 0.0
    %348 = vmatpush1.xpose.msra.mxu0 0.0
    %349 = vmatprep.subr.mxu0 0.0
    %350 = vmatpush1.xpose.msra.mxu0 0.0
    %351 = vmatprep.subr.mxu0 0.0
    %352 = vmatpush1.xpose.msra.mxu0 0.0
    %353 = vmatprep.subr.mxu0 0.0
    %354 = vmatpush1.xpose.msra.mxu0 0.0
    %355 = vmatprep.subr.mxu0 0.0
    %356 = vmatpush1.xpose.msra.mxu0 0.0
    %357 = vmatprep.subr.mxu0 0.0
    %358 = vmatpush1.xpose.msra.mxu0 0.0
    %359 = vmatprep.subr.mxu0 0.0
    %360 = vmatpush1.xpose.msra.mxu0 0.0
    %361 = vmatprep.subr.mxu0 0.0
    %362 = vmatpush1.xpose.msra.mxu0 0.0
    %363 = vmatprep.subr.mxu0 0.0
    %364 = vmatpush1.xpose.msra.mxu0 0.0
    %365 = vmatprep.subr.mxu0 0.0
    %366 = vmatpush1.xpose.msra.mxu0 0.0
    %367 = vmatprep.subr.mxu0 0.0
    %368 = vmatpush1.xpose.msra.mxu0 0.0
    %369 = vmatprep.subr.mxu0 0.0
    %370 = vmatpush1.xpose.msra.mxu0 0.0
    %371 = vmatprep.subr.mxu0 0.0
    %372 = vmatpush1.xpose.msra.mxu0 0.0
    %373 = vmatprep.subr.mxu0 0.0
    %374 = vmatpush1.xpose.msra.mxu0 0.0
    %375 = vmatprep.subr.mxu0 0.0
    %376 = vmatpush1.xpose.msra.mxu0 0.0
    %377 = vmatprep.subr.mxu0 0.0
    %378 = vmatpush1.xpose.msra.mxu0 0.0
    %379 = vmatprep.subr.mxu0 0.0
    %380 = vmatpush1.xpose.msra.mxu0 0.0
    %381 = vmatprep.subr.mxu0 0.0
    %382 = vmatpush1.xpose.msra.mxu0 0.0
    %383 = vmatprep.subr.mxu0 0.0
    %384 = vmatpush1.xpose.msra.mxu0 0.0
    %385 = vmatprep.subr.mxu0 0.0
    %386 = vmatpush1.xpose.msra.mxu0 0.0
    %387 = vmatprep.mubr.f32.mxu0 0.0
    %388 = vmatmul.mubr.f32.gmra.mrb[0].mxu0 %v319
    %v389 = vpop.f32.mrb[0].mxu0
    %v390 = vadd.f32 %v221, %v389
    %v391 = vpop.f32.mrb[0].mxu0
    %392 = vdwg.mxu0
    %v393 = vsel %vm301, %v390, -inf
    %394 = vmax.xlane.f32.xlu0 %v393
    %v395 = vpop.xlane.xlu0 %394
    %v396 = vsub.f32 %v390, %v395
    %v397 = vmul.f32 %v396, 1.442695
    %v398 = vpow.pop %v397
    %v399 = vsel %vm301, %v398, 0.0
    %400 = vadd.xlane.f32.xlu0 %v399
    %v401 = vpop.xlane.xlu0 %400
    %v402 = vmul.f32 %v401, 2.0
    %v403 = vrcp.pop %v402
    %v404 = vmul.f32 %v398, %v403
    %v405 = vadd.f32 %v314, %v404
    %v406 = vld [vmem:[%s4] sm:$0xff]
    %v407 = vsel %vm211, 1.0, %v405
    %409 = vset.pattern.permute.xlu0 0
    %410 = vperm.xlu0 %409, %v406
    %v411 = vpop.permute.xlu0 %410
    %v413 = vmul.f32 %v407, %v411
    %v414 = vsel %vm301, %v413, 0.0
    %415 = vadd.xlane.f32.xlu0 %v414
    %v416 = vpop.xlane.xlu0 %415
    %v417 = vadd.f32 %v416, 1.0
    %v418 = vrcp.pop %v417
    %v420 = vlaneseq
    %v421 = vshrl.u32 %v420, 7
    %v422 = vsub.s32 0, %v421
    %v423 = vrot.slane %v214, %v422
    %v426 = vsel %vm301, %v413, 0
    %428 = vmatprep.subr.mxu0 0.0
    %429 = vmatpush1.msra.mxu0 %v199
    %430 = vmatprep.subr.mxu0 0.0
    %431 = vmatpush1.msra.mxu0 0.0
    %432 = vmatprep.subr.mxu0 0.0
    %433 = vmatpush1.msra.mxu0 0.0
    %434 = vmatprep.subr.mxu0 0.0
    %435 = vmatpush1.msra.mxu0 0.0
    %436 = vmatprep.subr.mxu0 0.0
    %437 = vmatpush1.msra.mxu0 0.0
    %438 = vmatprep.subr.mxu0 0.0
    %439 = vmatpush1.msra.mxu0 0.0
    %440 = vmatprep.subr.mxu0 0.0
    %441 = vmatpush1.msra.mxu0 0.0
    %442 = vmatprep.subr.mxu0 0.0
    %443 = vmatpush1.msra.mxu0 0.0
    %444 = vmatprep.subr.mxu0 0.0
    %445 = vmatpush1.msra.mxu0 0.0
    %446 = vmatprep.subr.mxu0 0.0
    %447 = vmatpush1.msra.mxu0 0.0
    %448 = vmatprep.subr.mxu0 0.0
    %449 = vmatpush1.msra.mxu0 0.0
    %450 = vmatprep.subr.mxu0 0.0
    %451 = vmatpush1.msra.mxu0 0.0
    %452 = vmatprep.subr.mxu0 0.0
    %453 = vmatpush1.msra.mxu0 0.0
    %454 = vmatprep.subr.mxu0 0.0
    %455 = vmatpush1.msra.mxu0 0.0
    %456 = vmatprep.subr.mxu0 0.0
    %457 = vmatpush1.msra.mxu0 0.0
    %458 = vmatprep.subr.mxu0 0.0
    %459 = vmatpush1.msra.mxu0 0.0
    %460 = vmatprep.subr.mxu0 0.0
    %461 = vmatpush1.msra.mxu0 0.0
    %462 = vmatprep.subr.mxu0 0.0
    %463 = vmatpush1.msra.mxu0 0.0
    %464 = vmatprep.subr.mxu0 0.0
    %465 = vmatpush1.msra.mxu0 0.0
    %466 = vmatprep.subr.mxu0 0.0
    %467 = vmatpush1.msra.mxu0 0.0
    %468 = vmatprep.subr.mxu0 0.0
    %469 = vmatpush1.msra.mxu0 0.0
    %470 = vmatprep.subr.mxu0 0.0
    %471 = vmatpush1.msra.mxu0 0.0
    %472 = vmatprep.subr.mxu0 0.0
    %473 = vmatpush1.msra.mxu0 0.0
    %474 = vmatprep.subr.mxu0 0.0
    %475 = vmatpush1.msra.mxu0 0.0
    %476 = vmatprep.subr.mxu0 0.0
    %477 = vmatpush1.msra.mxu0 0.0
    %478 = vmatprep.subr.mxu0 0.0
    %479 = vmatpush1.msra.mxu0 0.0
    %480 = vmatprep.subr.mxu0 0.0
    %481 = vmatpush1.msra.mxu0 0.0
    %482 = vmatprep.subr.mxu0 0.0
    %483 = vmatpush1.msra.mxu0 0.0
    %484 = vmatprep.subr.mxu0 0.0
    %485 = vmatpush1.msra.mxu0 0.0
    %486 = vmatprep.subr.mxu0 0.0
    %487 = vmatpush1.msra.mxu0 0.0
    %488 = vmatprep.subr.mxu0 0.0
    %489 = vmatpush1.msra.mxu0 0.0
    %490 = vmatprep.subr.mxu0 0.0
    %491 = vmatpush1.msra.mxu0 0.0
    %492 = vmatprep.mubr.f32.mxu0 0.0
    %493 = vmatmul.mubr.f32.gmra.mrb[0].mxu0 %v426
    %v494 = vpop.f32.mrb[0].mxu0
    %v495 = vadd.f32 %v423, %v494
    %v496 = vpop.f32.mrb[0].mxu0
    %497 = vdwg.mxu0
    %v498 = vmul.f32 %v495, %v418
    %v499 = vmax.f32 %v498, 0.0
    %500 = vmatprep.subr.mxu0 0.0
    %501 = vmatpush1.msra.mxu0 %v499
    %502 = vmatprep.subr.mxu0 0.0
    %503 = vmatpush1.msra.mxu0 0.0
    %504 = vmatprep.subr.mxu0 0.0
    %505 = vmatpush1.msra.mxu0 0.0
    %506 = vmatprep.subr.mxu0 0.0
    %507 = vmatpush1.msra.mxu0 0.0
    %508 = vmatprep.subr.mxu0 0.0
    %509 = vmatpush1.msra.mxu0 0.0
    %510 = vmatprep.subr.mxu0 0.0
    %511 = vmatpush1.msra.mxu0 0.0
    %512 = vmatprep.subr.mxu0 0.0
    %513 = vmatpush1.msra.mxu0 0.0
    %514 = vmatprep.subr.mxu0 0.0
    %515 = vmatpush1.msra.mxu0 0.0
    %516 = vmatprep.subr.mxu0 0.0
    %517 = vmatpush1.msra.mxu0 0.0
    %518 = vmatprep.subr.mxu0 0.0
    %519 = vmatpush1.msra.mxu0 0.0
    %520 = vmatprep.subr.mxu0 0.0
    %521 = vmatpush1.msra.mxu0 0.0
    %522 = vmatprep.subr.mxu0 0.0
    %523 = vmatpush1.msra.mxu0 0.0
    %524 = vmatprep.subr.mxu0 0.0
    %525 = vmatpush1.msra.mxu0 0.0
    %526 = vmatprep.subr.mxu0 0.0
    %527 = vmatpush1.msra.mxu0 0.0
    %528 = vmatprep.subr.mxu0 0.0
    %529 = vmatpush1.msra.mxu0 0.0
    %530 = vmatprep.subr.mxu0 0.0
    %531 = vmatpush1.msra.mxu0 0.0
    %532 = vmatprep.subr.mxu0 0.0
    %533 = vmatpush1.msra.mxu0 0.0
    %534 = vmatprep.subr.mxu0 0.0
    %535 = vmatpush1.msra.mxu0 0.0
    %536 = vmatprep.subr.mxu0 0.0
    %537 = vmatpush1.msra.mxu0 0.0
    %538 = vmatprep.subr.mxu0 0.0
    %539 = vmatpush1.msra.mxu0 0.0
    %540 = vmatprep.subr.mxu0 0.0
    %541 = vmatpush1.msra.mxu0 0.0
    %542 = vmatprep.subr.mxu0 0.0
    %543 = vmatpush1.msra.mxu0 0.0
    %544 = vmatprep.subr.mxu0 0.0
    %545 = vmatpush1.msra.mxu0 0.0
    %546 = vmatprep.subr.mxu0 0.0
    %547 = vmatpush1.msra.mxu0 0.0
    %548 = vmatprep.subr.mxu0 0.0
    %549 = vmatpush1.msra.mxu0 0.0
    %550 = vmatprep.subr.mxu0 0.0
    %551 = vmatpush1.msra.mxu0 0.0
    %552 = vmatprep.subr.mxu0 0.0
    %553 = vmatpush1.msra.mxu0 0.0
    %554 = vmatprep.subr.mxu0 0.0
    %555 = vmatpush1.msra.mxu0 0.0
    %556 = vmatprep.subr.mxu0 0.0
    %557 = vmatpush1.msra.mxu0 0.0
    %558 = vmatprep.subr.mxu0 0.0
    %559 = vmatpush1.msra.mxu0 0.0
    %560 = vmatprep.subr.mxu0 0.0
    %561 = vmatpush1.msra.mxu0 0.0
    %562 = vmatprep.subr.mxu0 0.0
    %563 = vmatpush1.msra.mxu0 0.0
    %564 = vmatprep.mubr.f32.mxu0 0.0
    %565 = vmatmul.mubr.f32.gmra.mrb[0].mxu0 %v426
    %v566 = vpop.f32.mrb[0].mxu0
    %v567 = vadd.f32 0.0, %v566
    %v568 = vpop.f32.mrb[0].mxu0
    %569 = vdwg.mxu0
    %v571 = vlaneseq
    %v572 = vshrl.u32 %v571, 7
    %v573 = vsub.s32 0, %v572
    %v574 = vrot.slane %v215, %v573
    %v577 = vsel %vm226, %v567, 0
    %579 = vmatprep.subr.mxu0 0.0
    %580 = vmatpush1.msra.mxu0 %v212
    %581 = vmatprep.subr.mxu0 0.0
    %582 = vmatpush1.msra.mxu0 %v213
    %583 = vmatprep.subr.mxu0 0.0
    %584 = vmatpush1.msra.mxu0 0.0
    %585 = vmatprep.subr.mxu0 0.0
    %586 = vmatpush1.msra.mxu0 0.0
    %587 = vmatprep.subr.mxu0 0.0
    %588 = vmatpush1.msra.mxu0 0.0
    %589 = vmatprep.subr.mxu0 0.0
    %590 = vmatpush1.msra.mxu0 0.0
    %591 = vmatprep.subr.mxu0 0.0
    %592 = vmatpush1.msra.mxu0 0.0
    %593 = vmatprep.subr.mxu0 0.0
    %594 = vmatpush1.msra.mxu0 0.0
    %595 = vmatprep.subr.mxu0 0.0
    %596 = vmatpush1.msra.mxu0 0.0
    %597 = vmatprep.subr.mxu0 0.0
    %598 = vmatpush1.msra.mxu0 0.0
    %599 = vmatprep.subr.mxu0 0.0
    %600 = vmatpush1.msra.mxu0 0.0
    %601 = vmatprep.subr.mxu0 0.0
    %602 = vmatpush1.msra.mxu0 0.0
    %603 = vmatprep.subr.mxu0 0.0
    %604 = vmatpush1.msra.mxu0 0.0
    %605 = vmatprep.subr.mxu0 0.0
    %606 = vmatpush1.msra.mxu0 0.0
    %607 = vmatprep.subr.mxu0 0.0
    %608 = vmatpush1.msra.mxu0 0.0
    %609 = vmatprep.subr.mxu0 0.0
    %610 = vmatpush1.msra.mxu0 0.0
    %611 = vmatprep.subr.mxu0 0.0
    %612 = vmatpush1.msra.mxu0 0.0
    %613 = vmatprep.subr.mxu0 0.0
    %614 = vmatpush1.msra.mxu0 0.0
    %615 = vmatprep.subr.mxu0 0.0
    %616 = vmatpush1.msra.mxu0 0.0
    %617 = vmatprep.subr.mxu0 0.0
    %618 = vmatpush1.msra.mxu0 0.0
    %619 = vmatprep.subr.mxu0 0.0
    %620 = vmatpush1.msra.mxu0 0.0
    %621 = vmatprep.subr.mxu0 0.0
    %622 = vmatpush1.msra.mxu0 0.0
    %623 = vmatprep.subr.mxu0 0.0
    %624 = vmatpush1.msra.mxu0 0.0
    %625 = vmatprep.subr.mxu0 0.0
    %626 = vmatpush1.msra.mxu0 0.0
    %627 = vmatprep.subr.mxu0 0.0
    %628 = vmatpush1.msra.mxu0 0.0
    %629 = vmatprep.subr.mxu0 0.0
    %630 = vmatpush1.msra.mxu0 0.0
    %631 = vmatprep.subr.mxu0 0.0
    %632 = vmatpush1.msra.mxu0 0.0
    %633 = vmatprep.subr.mxu0 0.0
    %634 = vmatpush1.msra.mxu0 0.0
    %635 = vmatprep.subr.mxu0 0.0
    %636 = vmatpush1.msra.mxu0 0.0
    %637 = vmatprep.subr.mxu0 0.0
    %638 = vmatpush1.msra.mxu0 0.0
    %639 = vmatprep.subr.mxu0 0.0
    %640 = vmatpush1.msra.mxu0 0.0
    %641 = vmatprep.subr.mxu0 0.0
    %642 = vmatpush1.msra.mxu0 0.0
    %643 = vmatprep.mubr.f32.mxu0 0.0
    %644 = vmatmul.mubr.f32.gmra.mrb[0].mxu0 %v577
    %v645 = vpop.f32.mrb[0].mxu0
    %v646 = vadd.f32 %v574, %v645
    %v647 = vpop.f32.mrb[0].mxu0
    %648 = vdwg.mxu0
    %v649 = vmul.f32 %v646, %v418
    %v650 = vmax.f32 %v649, 0.0
    %651 = vst.msk [vmem:[#allocation2] sm:$0xff] %vm226, %v650
    %s652 = scalar_lea.vmem %s3, 1
    %v653 = vld [vmem:[%s652] sm:$0x1]
    %v655 = vlaneseq
    %v656 = vshrl.u32 %v655, 7
    %v657 = vsub.s32 0, %v656
    %v658 = vrot.slane %v653, %v657
    %661 = vrot.lane.b32.xlu0 %v125, 96
    %v662 = vpop.permute.xlu0 %661
    %v663 = vsel %vm226, %v125, 0
    %v665 = vsel %vm226, %v662, 0
    %667 = vmatprep.subr.mxu0 0.0
    %668 = vmatpush1.xpose.msra.mxu0 %v665
    %669 = vmatprep.subr.mxu0 0.0
    %670 = vmatpush1.xpose.msra.mxu0 0.0
    %671 = vmatprep.subr.mxu0 0.0
    %672 = vmatpush1.xpose.msra.mxu0 0.0
    %673 = vmatprep.subr.mxu0 0.0
    %674 = vmatpush1.xpose.msra.mxu0 0.0
    %675 = vmatprep.subr.mxu0 0.0
    %676 = vmatpush1.xpose.msra.mxu0 0.0
    %677 = vmatprep.subr.mxu0 0.0
    %678 = vmatpush1.xpose.msra.mxu0 0.0
    %679 = vmatprep.subr.mxu0 0.0
    %680 = vmatpush1.xpose.msra.mxu0 0.0
    %681 = vmatprep.subr.mxu0 0.0
    %682 = vmatpush1.xpose.msra.mxu0 0.0
    %683 = vmatprep.subr.mxu0 0.0
    %684 = vmatpush1.xpose.msra.mxu0 0.0
    %685 = vmatprep.subr.mxu0 0.0
    %686 = vmatpush1.xpose.msra.mxu0 0.0
    %687 = vmatprep.subr.mxu0 0.0
    %688 = vmatpush1.xpose.msra.mxu0 0.0
    %689 = vmatprep.subr.mxu0 0.0
    %690 = vmatpush1.xpose.msra.mxu0 0.0
    %691 = vmatprep.subr.mxu0 0.0
    %692 = vmatpush1.xpose.msra.mxu0 0.0
    %693 = vmatprep.subr.mxu0 0.0
    %694 = vmatpush1.xpose.msra.mxu0 0.0
    %695 = vmatprep.subr.mxu0 0.0
    %696 = vmatpush1.xpose.msra.mxu0 0.0
    %697 = vmatprep.subr.mxu0 0.0
    %698 = vmatpush1.xpose.msra.mxu0 0.0
    %699 = vmatprep.subr.mxu0 0.0
    %700 = vmatpush1.xpose.msra.mxu0 0.0
    %701 = vmatprep.subr.mxu0 0.0
    %702 = vmatpush1.xpose.msra.mxu0 0.0
    %703 = vmatprep.subr.mxu0 0.0
    %704 = vmatpush1.xpose.msra.mxu0 0.0
    %705 = vmatprep.subr.mxu0 0.0
    %706 = vmatpush1.xpose.msra.mxu0 0.0
    %707 = vmatprep.subr.mxu0 0.0
    %708 = vmatpush1.xpose.msra.mxu0 0.0
    %709 = vmatprep.subr.mxu0 0.0
    %710 = vmatpush1.xpose.msra.mxu0 0.0
    %711 = vmatprep.subr.mxu0 0.0
    %712 = vmatpush1.xpose.msra.mxu0 0.0
    %713 = vmatprep.subr.mxu0 0.0
    %714 = vmatpush1.xpose.msra.mxu0 0.0
    %715 = vmatprep.subr.mxu0 0.0
    %716 = vmatpush1.xpose.msra.mxu0 0.0
    %717 = vmatprep.subr.mxu0 0.0
    %718 = vmatpush1.xpose.msra.mxu0 0.0
    %719 = vmatprep.subr.mxu0 0.0
    %720 = vmatpush1.xpose.msra.mxu0 0.0
    %721 = vmatprep.subr.mxu0 0.0
    %722 = vmatpush1.xpose.msra.mxu0 0.0
    %723 = vmatprep.subr.mxu0 0.0
    %724 = vmatpush1.xpose.msra.mxu0 0.0
    %725 = vmatprep.subr.mxu0 0.0
    %726 = vmatpush1.xpose.msra.mxu0 0.0
    %727 = vmatprep.subr.mxu0 0.0
    %728 = vmatpush1.xpose.msra.mxu0 0.0
    %729 = vmatprep.subr.mxu0 0.0
    %730 = vmatpush1.xpose.msra.mxu0 0.0
    %731 = vmatprep.mubr.f32.mxu0 0.0
    %732 = vmatmul.mubr.f32.gmra.mrb[0].mxu0 %v663
    %v733 = vpop.f32.mrb[0].mxu0
    %v734 = vadd.f32 %v658, %v733
    %v735 = vpop.f32.mrb[0].mxu0
    %736 = vdwg.mxu0
    %v737 = vsel %vm301, %v734, -inf
    %738 = vmax.xlane.f32.xlu0 %v737
    %v739 = vpop.xlane.xlu0 %738
    %v740 = vsub.f32 %v734, %v739
    %v741 = vmul.f32 %v740, 1.442695
    %v742 = vpow.pop %v741
    %v743 = vsel %vm301, %v742, 0.0
    %744 = vadd.xlane.f32.xlu0 %v743
    %v745 = vpop.xlane.xlu0 %744
    %v746 = vmul.f32 %v745, 2.0
    %v747 = vrcp.pop %v746
    %v748 = vmul.f32 %v742, %v747
    %v749 = vadd.f32 %v748, 0.0
    %750 = vrot.lane.b32.xlu0 %v125, 112
    %v751 = vpop.permute.xlu0 %750
    %752 = vrot.lane.b32.xlu0 %v125, 80
    %v753 = vpop.permute.xlu0 %752
    %v754 = vsel %vm226, %v751, 0
    %v756 = vsel %vm226, %v753, 0
    %758 = vmatprep.subr.mxu0 0.0
    %759 = vmatpush1.xpose.msra.mxu0 %v756
    %760 = vmatprep.subr.mxu0 0.0
    %761 = vmatpush1.xpose.msra.mxu0 0.0
    %762 = vmatprep.subr.mxu0 0.0
    %763 = vmatpush1.xpose.msra.mxu0 0.0
    %764 = vmatprep.subr.mxu0 0.0
    %765 = vmatpush1.xpose.msra.mxu0 0.0
    %766 = vmatprep.subr.mxu0 0.0
    %767 = vmatpush1.xpose.msra.mxu0 0.0
    %768 = vmatprep.subr.mxu0 0.0
    %769 = vmatpush1.xpose.msra.mxu0 0.0
    %770 = vmatprep.subr.mxu0 0.0
    %771 = vmatpush1.xpose.msra.mxu0 0.0
    %772 = vmatprep.subr.mxu0 0.0
    %773 = vmatpush1.xpose.msra.mxu0 0.0
    %774 = vmatprep.subr.mxu0 0.0
    %775 = vmatpush1.xpose.msra.mxu0 0.0
    %776 = vmatprep.subr.mxu0 0.0
    %777 = vmatpush1.xpose.msra.mxu0 0.0
    %778 = vmatprep.subr.mxu0 0.0
    %779 = vmatpush1.xpose.msra.mxu0 0.0
    %780 = vmatprep.subr.mxu0 0.0
    %781 = vmatpush1.xpose.msra.mxu0 0.0
    %782 = vmatprep.subr.mxu0 0.0
    %783 = vmatpush1.xpose.msra.mxu0 0.0
    %784 = vmatprep.subr.mxu0 0.0
    %785 = vmatpush1.xpose.msra.mxu0 0.0
    %786 = vmatprep.subr.mxu0 0.0
    %787 = vmatpush1.xpose.msra.mxu0 0.0
    %788 = vmatprep.subr.mxu0 0.0
    %789 = vmatpush1.xpose.msra.mxu0 0.0
    %790 = vmatprep.subr.mxu0 0.0
    %791 = vmatpush1.xpose.msra.mxu0 0.0
    %792 = vmatprep.subr.mxu0 0.0
    %793 = vmatpush1.xpose.msra.mxu0 0.0
    %794 = vmatprep.subr.mxu0 0.0
    %795 = vmatpush1.xpose.msra.mxu0 0.0
    %796 = vmatprep.subr.mxu0 0.0
    %797 = vmatpush1.xpose.msra.mxu0 0.0
    %798 = vmatprep.subr.mxu0 0.0
    %799 = vmatpush1.xpose.msra.mxu0 0.0
    %800 = vmatprep.subr.mxu0 0.0
    %801 = vmatpush1.xpose.msra.mxu0 0.0
    %802 = vmatprep.subr.mxu0 0.0
    %803 = vmatpush1.xpose.msra.mxu0 0.0
    %804 = vmatprep.subr.mxu0 0.0
    %805 = vmatpush1.xpose.msra.mxu0 0.0
    %806 = vmatprep.subr.mxu0 0.0
    %807 = vmatpush1.xpose.msra.mxu0 0.0
    %808 = vmatprep.subr.mxu0 0.0
    %809 = vmatpush1.xpose.msra.mxu0 0.0
    %810 = vmatprep.subr.mxu0 0.0
    %811 = vmatpush1.xpose.msra.mxu0 0.0
    %812 = vmatprep.subr.mxu0 0.0
    %813 = vmatpush1.xpose.msra.mxu0 0.0
    %814 = vmatprep.subr.mxu0 0.0
    %815 = vmatpush1.xpose.msra.mxu0 0.0
    %816 = vmatprep.subr.mxu0 0.0
    %817 = vmatpush1.xpose.msra.mxu0 0.0
    %818 = vmatprep.subr.mxu0 0.0
    %819 = vmatpush1.xpose.msra.mxu0 0.0
    %820 = vmatprep.subr.mxu0 0.0
    %821 = vmatpush1.xpose.msra.mxu0 0.0
    %822 = vmatprep.mubr.f32.mxu0 0.0
    %823 = vmatmul.mubr.f32.gmra.mrb[0].mxu0 %v754
    %v824 = vpop.f32.mrb[0].mxu0
    %v825 = vadd.f32 %v658, %v824
    %v826 = vpop.f32.mrb[0].mxu0
    %827 = vdwg.mxu0
    %v828 = vsel %vm301, %v825, -inf
    %829 = vmax.xlane.f32.xlu0 %v828
    %v830 = vpop.xlane.xlu0 %829
    %v831 = vsub.f32 %v825, %v830
    %v832 = vmul.f32 %v831, 1.442695
    %v833 = vpow.pop %v832
    %v834 = vsel %vm301, %v833, 0.0
    %835 = vadd.xlane.f32.xlu0 %v834
    %v836 = vpop.xlane.xlu0 %835
    %v837 = vmul.f32 %v836, 2.0
    %v838 = vrcp.pop %v837
    %v839 = vmul.f32 %v833, %v838
    %v840 = vadd.f32 %v749, %v839
    %s841 = scalar_lea.vmem %s4, 8
    %v842 = vld [vmem:[%s841] sm:$0xff]
    %v843 = vsel %vm211, 1.0, %v840
    %845 = vset.pattern.permute.xlu0 0
    %846 = vperm.xlu0 %845, %v842
    %v847 = vpop.permute.xlu0 %846
    %v849 = vmul.f32 %v843, %v847
    %v850 = vsel %vm301, %v849, 0.0
    %851 = vadd.xlane.f32.xlu0 %v850
    %v852 = vpop.xlane.xlu0 %851
    %v853 = vadd.f32 %v852, 1.0
    %v854 = vrcp.pop %v853
    %v856 = vsel %vm301, %v849, 0
    %858 = vmatprep.subr.mxu0 0.0
    %859 = vmatpush1.msra.mxu0 %v204
    %860 = vmatprep.subr.mxu0 0.0
    %861 = vmatpush1.msra.mxu0 0.0
    %862 = vmatprep.subr.mxu0 0.0
    %863 = vmatpush1.msra.mxu0 0.0
    %864 = vmatprep.subr.mxu0 0.0
    %865 = vmatpush1.msra.mxu0 0.0
    %866 = vmatprep.subr.mxu0 0.0
    %867 = vmatpush1.msra.mxu0 0.0
    %868 = vmatprep.subr.mxu0 0.0
    %869 = vmatpush1.msra.mxu0 0.0
    %870 = vmatprep.subr.mxu0 0.0
    %871 = vmatpush1.msra.mxu0 0.0
    %872 = vmatprep.subr.mxu0 0.0
    %873 = vmatpush1.msra.mxu0 0.0
    %874 = vmatprep.subr.mxu0 0.0
    %875 = vmatpush1.msra.mxu0 0.0
    %876 = vmatprep.subr.mxu0 0.0
    %877 = vmatpush1.msra.mxu0 0.0
    %878 = vmatprep.subr.mxu0 0.0
    %879 = vmatpush1.msra.mxu0 0.0
    %880 = vmatprep.subr.mxu0 0.0
    %881 = vmatpush1.msra.mxu0 0.0
    %882 = vmatprep.subr.mxu0 0.0
    %883 = vmatpush1.msra.mxu0 0.0
    %884 = vmatprep.subr.mxu0 0.0
    %885 = vmatpush1.msra.mxu0 0.0
    %886 = vmatprep.subr.mxu0 0.0
    %887 = vmatpush1.msra.mxu0 0.0
    %888 = vmatprep.subr.mxu0 0.0
    %889 = vmatpush1.msra.mxu0 0.0
    %890 = vmatprep.subr.mxu0 0.0
    %891 = vmatpush1.msra.mxu0 0.0
    %892 = vmatprep.subr.mxu0 0.0
    %893 = vmatpush1.msra.mxu0 0.0
    %894 = vmatprep.subr.mxu0 0.0
    %895 = vmatpush1.msra.mxu0 0.0
    %896 = vmatprep.subr.mxu0 0.0
    %897 = vmatpush1.msra.mxu0 0.0
    %898 = vmatprep.subr.mxu0 0.0
    %899 = vmatpush1.msra.mxu0 0.0
    %900 = vmatprep.subr.mxu0 0.0
    %901 = vmatpush1.msra.mxu0 0.0
    %902 = vmatprep.subr.mxu0 0.0
    %903 = vmatpush1.msra.mxu0 0.0
    %904 = vmatprep.subr.mxu0 0.0
    %905 = vmatpush1.msra.mxu0 0.0
    %906 = vmatprep.subr.mxu0 0.0
    %907 = vmatpush1.msra.mxu0 0.0
    %908 = vmatprep.subr.mxu0 0.0
    %909 = vmatpush1.msra.mxu0 0.0
    %910 = vmatprep.subr.mxu0 0.0
    %911 = vmatpush1.msra.mxu0 0.0
    %912 = vmatprep.subr.mxu0 0.0
    %913 = vmatpush1.msra.mxu0 0.0
    %914 = vmatprep.subr.mxu0 0.0
    %915 = vmatpush1.msra.mxu0 0.0
    %916 = vmatprep.subr.mxu0 0.0
    %917 = vmatpush1.msra.mxu0 0.0
    %918 = vmatprep.subr.mxu0 0.0
    %919 = vmatpush1.msra.mxu0 0.0
    %920 = vmatprep.subr.mxu0 0.0
    %921 = vmatpush1.msra.mxu0 0.0
    %922 = vmatprep.mubr.f32.mxu0 0.0
    %923 = vmatmul.mubr.f32.gmra.mrb[0].mxu0 %v856
    %v924 = vpop.f32.mrb[0].mxu0
    %v925 = vadd.f32 %v423, %v924
    %v926 = vpop.f32.mrb[0].mxu0
    %927 = vdwg.mxu0
    %v928 = vmul.f32 %v925, %v854
    %v929 = vmax.f32 %v928, 0.0
    %930 = vmatprep.subr.mxu0 0.0
    %931 = vmatpush1.msra.mxu0 %v929
    %932 = vmatprep.subr.mxu0 0.0
    %933 = vmatpush1.msra.mxu0 0.0
    %934 = vmatprep.subr.mxu0 0.0
    %935 = vmatpush1.msra.mxu0 0.0
    %936 = vmatprep.subr.mxu0 0.0
    %937 = vmatpush1.msra.mxu0 0.0
    %938 = vmatprep.subr.mxu0 0.0
    %939 = vmatpush1.msra.mxu0 0.0
    %940 = vmatprep.subr.mxu0 0.0
    %941 = vmatpush1.msra.mxu0 0.0
    %942 = vmatprep.subr.mxu0 0.0
    %943 = vmatpush1.msra.mxu0 0.0
    %944 = vmatprep.subr.mxu0 0.0
    %945 = vmatpush1.msra.mxu0 0.0
    %946 = vmatprep.subr.mxu0 0.0
    %947 = vmatpush1.msra.mxu0 0.0
    %948 = vmatprep.subr.mxu0 0.0
    %949 = vmatpush1.msra.mxu0 0.0
    %950 = vmatprep.subr.mxu0 0.0
    %951 = vmatpush1.msra.mxu0 0.0
    %952 = vmatprep.subr.mxu0 0.0
    %953 = vmatpush1.msra.mxu0 0.0
    %954 = vmatprep.subr.mxu0 0.0
    %955 = vmatpush1.msra.mxu0 0.0
    %956 = vmatprep.subr.mxu0 0.0
    %957 = vmatpush1.msra.mxu0 0.0
    %958 = vmatprep.subr.mxu0 0.0
    %959 = vmatpush1.msra.mxu0 0.0
    %960 = vmatprep.subr.mxu0 0.0
    %961 = vmatpush1.msra.mxu0 0.0
    %962 = vmatprep.subr.mxu0 0.0
    %963 = vmatpush1.msra.mxu0 0.0
    %964 = vmatprep.subr.mxu0 0.0
    %965 = vmatpush1.msra.mxu0 0.0
    %966 = vmatprep.subr.mxu0 0.0
    %967 = vmatpush1.msra.mxu0 0.0
    %968 = vmatprep.subr.mxu0 0.0
    %969 = vmatpush1.msra.mxu0 0.0
    %970 = vmatprep.subr.mxu0 0.0
    %971 = vmatpush1.msra.mxu0 0.0
    %972 = vmatprep.subr.mxu0 0.0
    %973 = vmatpush1.msra.mxu0 0.0
    %974 = vmatprep.subr.mxu0 0.0
    %975 = vmatpush1.msra.mxu0 0.0
    %976 = vmatprep.subr.mxu0 0.0
    %977 = vmatpush1.msra.mxu0 0.0
    %978 = vmatprep.subr.mxu0 0.0
    %979 = vmatpush1.msra.mxu0 0.0
    %980 = vmatprep.subr.mxu0 0.0
    %981 = vmatpush1.msra.mxu0 0.0
    %982 = vmatprep.subr.mxu0 0.0
    %983 = vmatpush1.msra.mxu0 0.0
    %984 = vmatprep.subr.mxu0 0.0
    %985 = vmatpush1.msra.mxu0 0.0
    %986 = vmatprep.subr.mxu0 0.0
    %987 = vmatpush1.msra.mxu0 0.0
    %988 = vmatprep.subr.mxu0 0.0
    %989 = vmatpush1.msra.mxu0 0.0
    %990 = vmatprep.subr.mxu0 0.0
    %991 = vmatpush1.msra.mxu0 0.0
    %992 = vmatprep.subr.mxu0 0.0
    %993 = vmatpush1.msra.mxu0 0.0
    %994 = vmatprep.mubr.f32.mxu0 0.0
    %995 = vmatmul.mubr.f32.gmra.mrb[0].mxu0 %v856
    %v996 = vpop.f32.mrb[0].mxu0
    %v997 = vadd.f32 0.0, %v996
    %v998 = vpop.f32.mrb[0].mxu0
    %999 = vdwg.mxu0
    %v1001 = vsel %vm226, %v997, 0
    %1003 = vmatprep.subr.mxu0 0.0
    %1004 = vmatpush1.msra.mxu0 %v212
    %1005 = vmatprep.subr.mxu0 0.0
    %1006 = vmatpush1.msra.mxu0 %v213
    %1007 = vmatprep.subr.mxu0 0.0
    %1008 = vmatpush1.msra.mxu0 0.0
    %1009 = vmatprep.subr.mxu0 0.0
    %1010 = vmatpush1.msra.mxu0 0.0
    %1011 = vmatprep.subr.mxu0 0.0
    %1012 = vmatpush1.msra.mxu0 0.0
    %1013 = vmatprep.subr.mxu0 0.0
    %1014 = vmatpush1.msra.mxu0 0.0
    %1015 = vmatprep.subr.mxu0 0.0
    %1016 = vmatpush1.msra.mxu0 0.0
    %1017 = vmatprep.subr.mxu0 0.0
    %1018 = vmatpush1.msra.mxu0 0.0
    %1019 = vmatprep.subr.mxu0 0.0
    %1020 = vmatpush1.msra.mxu0 0.0
    %1021 = vmatprep.subr.mxu0 0.0
    %1022 = vmatpush1.msra.mxu0 0.0
    %1023 = vmatprep.subr.mxu0 0.0
    %1024 = vmatpush1.msra.mxu0 0.0
    %1025 = vmatprep.subr.mxu0 0.0
    %1026 = vmatpush1.msra.mxu0 0.0
    %1027 = vmatprep.subr.mxu0 0.0
    %1028 = vmatpush1.msra.mxu0 0.0
    %1029 = vmatprep.subr.mxu0 0.0
    %1030 = vmatpush1.msra.mxu0 0.0
    %1031 = vmatprep.subr.mxu0 0.0
    %1032 = vmatpush1.msra.mxu0 0.0
    %1033 = vmatprep.subr.mxu0 0.0
    %1034 = vmatpush1.msra.mxu0 0.0
    %1035 = vmatprep.subr.mxu0 0.0
    %1036 = vmatpush1.msra.mxu0 0.0
    %1037 = vmatprep.subr.mxu0 0.0
    %1038 = vmatpush1.msra.mxu0 0.0
    %1039 = vmatprep.subr.mxu0 0.0
    %1040 = vmatpush1.msra.mxu0 0.0
    %1041 = vmatprep.subr.mxu0 0.0
    %1042 = vmatpush1.msra.mxu0 0.0
    %1043 = vmatprep.subr.mxu0 0.0
    %1044 = vmatpush1.msra.mxu0 0.0
    %1045 = vmatprep.subr.mxu0 0.0
    %1046 = vmatpush1.msra.mxu0 0.0
    %1047 = vmatprep.subr.mxu0 0.0
    %1048 = vmatpush1.msra.mxu0 0.0
    %1049 = vmatprep.subr.mxu0 0.0
    %1050 = vmatpush1.msra.mxu0 0.0
    %1051 = vmatprep.subr.mxu0 0.0
    %1052 = vmatpush1.msra.mxu0 0.0
    %1053 = vmatprep.subr.mxu0 0.0
    %1054 = vmatpush1.msra.mxu0 0.0
    %1055 = vmatprep.subr.mxu0 0.0
    %1056 = vmatpush1.msra.mxu0 0.0
    %1057 = vmatprep.subr.mxu0 0.0
    %1058 = vmatpush1.msra.mxu0 0.0
    %1059 = vmatprep.subr.mxu0 0.0
    %1060 = vmatpush1.msra.mxu0 0.0
    %1061 = vmatprep.subr.mxu0 0.0
    %1062 = vmatpush1.msra.mxu0 0.0
    %1063 = vmatprep.subr.mxu0 0.0
    %1064 = vmatpush1.msra.mxu0 0.0
    %1065 = vmatprep.subr.mxu0 0.0
    %1066 = vmatpush1.msra.mxu0 0.0
    %1067 = vmatprep.mubr.f32.mxu0 0.0
    %1068 = vmatmul.mubr.f32.gmra.mrb[0].mxu0 %v1001
    %v1069 = vpop.f32.mrb[0].mxu0
    %v1070 = vadd.f32 %v574, %v1069
    %v1071 = vpop.f32.mrb[0].mxu0
    %1072 = vdwg.mxu0
    %v1073 = vmul.f32 %v1070, %v854
    %v1074 = vmax.f32 %v1073, 0.0
    %s1075 = scalar_lea.vmem [#allocation2], 8
    %1076 = vst.msk [vmem:[%s1075] sm:$0xff] %vm226, %v1074
    // Predicated region
    $region38: #{gcn_forward.1} parent=1 // pred_check
      _
    $region39: #{gcn_forward.1} parent=1 // pred_check_branch
      %1078 = sbr.rel (0) target = $region41
    $region40: #{gcn_forward.1} parent=1 // pred_region
      %s1080 = ssub.s32 256, 256
      %1081 = vsyncadd [#allocation3], %s1080
      %s1082 = sshll.u32 [#allocation2], 4
      %s1083 = int_to_ptr.vmem [resolvable:$true] %s1082
      %1088 = dma.vmem_to_hbm [thread:$0]  %s1083, 256, %s9, [#allocation3], 128, 128, 8
    $region41: #{gcn_forward.1} parent=1 // pred_fallthru
      _
    // Predicated region
    $region42: #{gcn_forward.1} parent=1 // pred_check
      _
    $region43: #{gcn_forward.1} parent=1 // pred_check_branch
      %1090 = sbr.rel (0) target = $region45
    $region44: #{gcn_forward.1} parent=1 // pred_region
      %1091 = dma.done [#allocation3], 256
    $region45: #{gcn_forward.1} parent=1 // pred_fallthru
      _
    %1092 = vsyncpa [#allocation3], 1

</llo_original>
